<compile_context>
chip_gen: v5e
topology: v5e:2x2
jax: 0.10.0
libtpu: 0.0.40
codegen_flags: <defaults>
</compile_context>

<pallas_src>
import jax
import jax.numpy as jnp
from jax.experimental import pallas as pl
from jax.experimental.pallas import tpu as pltpu

EPS = 1e-5  # PyTorch InstanceNorm2d default eps (affine=False, biased variance)


# ---------------------------------------------------------------------------
# Fused kernel factory (static H, W, N, channels baked in)
# ---------------------------------------------------------------------------
def _make_block_kernel(H, W, N, Cin, Cout):
    S = H * W
    L = N * S
    Ho, Wo = (H + 1) // 2, (W + 1) // 2
    So = Ho * Wo
    # static lane offsets of the 9 taps of a 3x3 kernel, row-major (dh, dw)
    offsets = [(dh - 1) * W + (dw - 1) for dh in range(3) for dw in range(3)]

    def lane_shift(a, off):
        # b[:, p] = a[:, (p + off) mod L].  Wrapped / out-of-image entries are zeroed by the
        # boundary mask (in-bounds taps never cross an image's contiguous S-lane block).
        if off == 0:
            return a
        return pltpu.roll(a, shift=(-off) % L, axis=1)  # single XLU lane rotate

    def conv3x3(a, w, mask):
        # a: (C, L) f32, w: (Cout, 9*C) bf16, mask: (9, L) bf16 in {0,1}
        taps = []
        for t, off in enumerate(offsets):
            # cast-to-bf16 then sublane-broadcast multiply by this tap's (1, L) mask row
            taps.append(lane_shift(a, off).astype(jnp.bfloat16) * mask[t:t + 1, :])
        p = jnp.concatenate(taps, axis=0)                            # (9*C, L) bf16
        return jnp.dot(w, p, preferred_element_type=jnp.float32)     # (Cout, L) f32

    def inorm_relu(y, seg):
        # per-image InstanceNorm (biased, two-pass variance) + ReLU; each image is one
        # contiguous `seg`-lane block of the lane axis.
        nseg = y.shape[1] // seg
        outs = []
        for n in range(nseg):
            blk = y[:, n * seg:(n + 1) * seg]
            mean = jnp.mean(blk, axis=1, keepdims=True)
            ctr = blk - mean
            var = jnp.mean(ctr * ctr, axis=1, keepdims=True)
            outs.append(jnp.maximum(ctr * jax.lax.rsqrt(var + EPS), 0.0))
        return outs[0] if nseg == 1 else jnp.concatenate(outs, axis=1)

    def kernel(x_ref, m_ref, w1_ref, w2_ref, w3_ref, sel_ref, o_ref):
        mask = m_ref[...]                                            # (9, L) bf16, read once
        a0 = x_ref[...]                                              # (Cin, L) f32
        a1 = inorm_relu(conv3x3(a0, w1_ref[...], mask), S)           # (Cin, L) f32
        a2 = inorm_relu(conv3x3(a1, w2_ref[...], mask), S)           # (Cin, L) f32
        y3 = conv3x3(a2, w3_ref[...], mask)                          # (Cout, L) f32, full-res
        # stride-2 downsample = bf16 one-hot selection matmul -> (Cout, N*So) = (Cout, 128)
        y3d = jnp.dot(y3.astype(jnp.bfloat16), sel_ref[...],
                      preferred_element_type=jnp.float32)
        o_ref[...] = inorm_relu(y3d, So)                             # lane-dense f32 store

    return kernel


# ---------------------------------------------------------------------------
# Host-side constant builders / weight packing (XLA, constant-folded under jit)
# ---------------------------------------------------------------------------
def _pack_weight(w_oihw):
    # (Cout, Cin, 3, 3) -> (Cout, 9*Cin) with column index k = (dh*3+dw)*Cin + ci,
    # matching the in-kernel tap concat order.
    co, ci, kh, kw = w_oihw.shape
    return jnp.transpose(w_oihw, (0, 2, 3, 1)).reshape(co, kh * kw * ci).astype(jnp.bfloat16)


def _boundary_mask(H, W, N):
    # (9, N*H*W) 0/1 mask: row t=dh*3+dw is 1 where that tap at output pixel (i, j) reads an
    # in-bounds input pixel (zero padding=1 otherwise); tiled across the N lane-folded images.
    rows = jnp.arange(H)[:, None]
    cols = jnp.arange(W)[None, :]
    blocks = []
    for dh in range(3):
        for dw in range(3):
            ok = ((rows + dh - 1 >= 0) & (rows + dh - 1 < H) &
                  (cols + dw - 1 >= 0) & (cols + dw - 1 < W))
            blocks.append(ok.reshape(1, H * W))
    m = jnp.concatenate(blocks, axis=0).astype(jnp.bfloat16)          # (9, S)
    return jnp.tile(m, (1, N))                                        # (9, N*S)


def _stride2_selector(H, W, N):
    # (N*H*W, N*Ho*Wo) bf16 one-hot columns picking the even-grid pixels of each image.
    Ho, Wo = (H + 1) // 2, (W + 1) // 2
    S, So = H * W, Ho * Wo
    src_within = (jnp.arange(Ho)[:, None] * 2 * W + jnp.arange(Wo)[None, :] * 2).reshape(-1)
    src = (jnp.arange(N)[:, None] * S + src_within[None, :]).reshape(-1)   # (N*So,)
    sel = (jnp.arange(N * S)[:, None] == src[None, :])
    return sel.astype(jnp.bfloat16)


# ---------------------------------------------------------------------------
# DownConvBlock forward (NCHW in / NCHW out, like the PyTorch module)
# ---------------------------------------------------------------------------
@jax.jit
def down_conv_block(x_nchw, params):
    N, Cin, H, W = x_nchw.shape
    Cout = params["w3"].shape[0]
    S = H * W
    L = N * S
    Ho, Wo = (H + 1) // 2, (W + 1) // 2
    So = Ho * Wo

    # channels-first, batch folded into the lane axis: x_flat[c, n*S + s] = x[n, c, s]
    x_flat = jnp.transpose(x_nchw.reshape(N, Cin, S), (1, 0, 2)).reshape(Cin, L)
    x_flat = x_flat.astype(jnp.float32)
    mask = _boundary_mask(H, W, N)            # (9, L)     bf16
    sel = _stride2_selector(H, W, N)          # (L, N*So)  bf16
    w1 = _pack_weight(params["w1"])
    w2 = _pack_weight(params["w2"])
    w3 = _pack_weight(params["w3"])
    # NOTE: conv biases (params["b*"]) are intentionally NOT used: adding a per-channel
    # constant before an affine=False InstanceNorm cancels exactly in (y - mean).

    K = 9 * Cin
    flops = 2 * K * L * (2 * Cin + Cout) + 2 * L * Cout * (N * So)
    bytes_accessed = (Cin * L * 4 + 9 * L * 2 + K * (2 * Cin + Cout) * 2
                      + L * (N * So) * 2 + Cout * (N * So) * 4)

    kernel = _make_block_kernel(H, W, N, Cin, Cout)
    out = pl.pallas_call(
        kernel,
        out_shape=jax.ShapeDtypeStruct((Cout, N * So), jnp.float32),
        grid_spec=pltpu.PrefetchScalarGridSpec(
            num_scalar_prefetch=0,
            grid=(1,),
            in_specs=[
                pl.BlockSpec((Cin, L), lambda i: (0, 0)),          # x (all images, lane-folded)
                pl.BlockSpec((9, L), lambda i: (0, 0)),            # boundary mask (9 rows)
                pl.BlockSpec((Cin, K), lambda i: (0, 0)),          # w1
                pl.BlockSpec((Cin, K), lambda i: (0, 0)),          # w2
                pl.BlockSpec((Cout, K), lambda i: (0, 0)),         # w3
                pl.BlockSpec((L, N * So), lambda i: (0, 0)),       # stride-2 selector (bf16)
            ],
            out_specs=pl.BlockSpec((Cout, N * So), lambda i: (0, 0)),
        ),
        compiler_params=pltpu.CompilerParams(
            dimension_semantics=("arbitrary",)),
        cost_estimate=pl.CostEstimate(
            flops=flops,
            transcendentals=N * (2 * Cin + Cout),
            bytes_accessed=bytes_accessed),
    )(x_flat, mask, w1, w2, w3, sel)

    # (Cout, N*So) -> (N, Cout, Ho, Wo)
    return jnp.transpose(out.reshape(Cout, N, Ho, Wo), (1, 0, 2, 3))


# ---------------------------------------------------------------------------
# Deterministic parameter init (PyTorch-like uniform fan-in bounds)
# ---------------------------------------------------------------------------
def init_params(key, ch_in, ch_out):
    def conv_init(k, cout, cin):
        kw, kb = jax.random.split(k)
        bound = 1.0 / (cin * 9) ** 0.5
        w = jax.random.uniform(kw, (cout, cin, 3, 3), jnp.float32, -bound, bound)
        b = jax.random.uniform(kb, (cout,), jnp.float32, -bound, bound)
        return w, b

    k1, k2, k3 = jax.random.split(key, 3)
    w1, b1 = conv_init(k1, ch_in, ch_in)
    w2, b2 = conv_init(k2, ch_in, ch_in)
    w3, b3 = conv_init(k3, ch_out, ch_in)
    return dict(w1=w1, b1=b1, w2=w2, b2=b2, w3=w3, b3=b3)


# ---------------------------------------------------------------------------
# Pure-JAX reference (for correctness check only; includes the bias)
# ---------------------------------------------------------------------------
def _ref_forward(x_nchw, params):
    def conv(x, w, b, stride):
        y = jax.lax.conv_general_dilated(
            x, w, window_strides=(stride, stride), padding=((1, 1), (1, 1)),
            dimension_numbers=("NCHW", "OIHW", "NCHW"),
            precision=jax.lax.Precision.HIGHEST)
        return y + b[None, :, None, None]

    def inorm_relu(y):
        m = jnp.mean(y, axis=(2, 3), keepdims=True)
        v = jnp.mean((y - m) ** 2, axis=(2, 3), keepdims=True)
        return jnp.maximum((y - m) * jax.lax.rsqrt(v + EPS), 0.0)

    x = inorm_relu(conv(x_nchw, params["w1"], params["b1"], 1))
    x = inorm_relu(conv(x, params["w2"], params["b2"], 1))
    x = inorm_relu(conv(x, params["w3"], params["b3"], 2))
    return x


if __name__ == "__main__":
    ch_in, ch_out = 4, 8
    x = jax.random.normal(jax.random.PRNGKey(0), (2, ch_in, 16, 16), dtype=jnp.float32)
    params = init_params(jax.random.PRNGKey(42), ch_in, ch_out)

    out = jax.block_until_ready(down_conv_block(x, params))
    ref = jax.block_until_ready(_ref_forward(x, params))

    assert out.shape == (2, ch_out, 8, 8), out.shape
    max_err = float(jnp.max(jnp.abs(out - ref)))
    assert max_err < 5e-2, f"max_err={max_err}"
    print("KERNEL_OK")
</pallas_src>

<mosaic_0001>
module attributes {stable_mosaic.version = 11 : i64} {
  func.func @kernel(%arg0: i32, %arg1: memref<4x512xf32, #tpu.memory_space<vmem>>, %arg2: memref<9x512xbf16, #tpu.memory_space<vmem>>, %arg3: memref<4x36xbf16, #tpu.memory_space<vmem>>, %arg4: memref<4x36xbf16, #tpu.memory_space<vmem>>, %arg5: memref<8x36xbf16, #tpu.memory_space<vmem>>, %arg6: memref<512x128xbf16, #tpu.memory_space<vmem>>, %arg7: memref<8x128xf32, #tpu.memory_space<vmem>>) attributes {dimension_semantics = [#tpu.dimension_semantics<arbitrary>], iteration_bounds = array<i64: 1>, scalar_prefetch = 0 : i64, scratch_operands = 0 : i64, tpu.core_type = #tpu.core_type<tc>, window_params = [{pipeline_mode = #tpu.pipeline_mode<synchronous>, transform_indices = @transform_0, window_bounds = array<i64: 4, 512>}, {pipeline_mode = #tpu.pipeline_mode<synchronous>, transform_indices = @transform_1, window_bounds = array<i64: 9, 512>}, {pipeline_mode = #tpu.pipeline_mode<synchronous>, transform_indices = @transform_2, window_bounds = array<i64: 4, 36>}, {pipeline_mode = #tpu.pipeline_mode<synchronous>, transform_indices = @transform_3, window_bounds = array<i64: 4, 36>}, {pipeline_mode = #tpu.pipeline_mode<synchronous>, transform_indices = @transform_4, window_bounds = array<i64: 8, 36>}, {pipeline_mode = #tpu.pipeline_mode<synchronous>, transform_indices = @transform_5, window_bounds = array<i64: 512, 128>}, {pipeline_mode = #tpu.pipeline_mode<synchronous>, transform_indices = @transform_6, window_bounds = array<i64: 8, 128>}]} {
    %c0 = arith.constant 0 : index
    %c0_0 = arith.constant 0 : index
    %0 = vector.load %arg2[%c0, %c0_0] : memref<9x512xbf16, #tpu.memory_space<vmem>>, vector<9x512xbf16>
    %c0_1 = arith.constant 0 : index
    %c0_2 = arith.constant 0 : index
    %1 = vector.load %arg1[%c0_1, %c0_2] : memref<4x512xf32, #tpu.memory_space<vmem>>, vector<4x512xf32>
    %c0_3 = arith.constant 0 : index
    %c0_4 = arith.constant 0 : index
    %2 = vector.load %arg3[%c0_3, %c0_4] : memref<4x36xbf16, #tpu.memory_space<vmem>>, vector<4x36xbf16>
    %c17_i32 = arith.constant 17 : i32
    %3 = tpu.dynamic_rotate %1 by %c17_i32 dim 1 : vector<4x512xf32>, i32 -> vector<4x512xf32>
    %4 = arith.truncf %3 : vector<4x512xf32> to vector<4x512xbf16>
    %5 = vector.extract_strided_slice %0 {offsets = [0, 0], sizes = [1, 512], strides = [1, 1]} : vector<9x512xbf16> to vector<1x512xbf16>
    %6 = vector.broadcast %5 : vector<1x512xbf16> to vector<4x512xbf16>
    %7 = arith.mulf %4, %6 : vector<4x512xbf16>
    %c16_i32 = arith.constant 16 : i32
    %8 = tpu.dynamic_rotate %1 by %c16_i32 dim 1 : vector<4x512xf32>, i32 -> vector<4x512xf32>
    %9 = arith.truncf %8 : vector<4x512xf32> to vector<4x512xbf16>
    %10 = vector.extract_strided_slice %0 {offsets = [1, 0], sizes = [1, 512], strides = [1, 1]} : vector<9x512xbf16> to vector<1x512xbf16>
    %11 = vector.broadcast %10 : vector<1x512xbf16> to vector<4x512xbf16>
    %12 = arith.mulf %9, %11 : vector<4x512xbf16>
    %c15_i32 = arith.constant 15 : i32
    %13 = tpu.dynamic_rotate %1 by %c15_i32 dim 1 : vector<4x512xf32>, i32 -> vector<4x512xf32>
    %14 = arith.truncf %13 : vector<4x512xf32> to vector<4x512xbf16>
    %15 = vector.extract_strided_slice %0 {offsets = [2, 0], sizes = [1, 512], strides = [1, 1]} : vector<9x512xbf16> to vector<1x512xbf16>
    %16 = vector.broadcast %15 : vector<1x512xbf16> to vector<4x512xbf16>
    %17 = arith.mulf %14, %16 : vector<4x512xbf16>
    %c1_i32 = arith.constant 1 : i32
    %18 = tpu.dynamic_rotate %1 by %c1_i32 dim 1 : vector<4x512xf32>, i32 -> vector<4x512xf32>
    %19 = arith.truncf %18 : vector<4x512xf32> to vector<4x512xbf16>
    %20 = vector.extract_strided_slice %0 {offsets = [3, 0], sizes = [1, 512], strides = [1, 1]} : vector<9x512xbf16> to vector<1x512xbf16>
    %21 = vector.broadcast %20 : vector<1x512xbf16> to vector<4x512xbf16>
    %22 = arith.mulf %19, %21 : vector<4x512xbf16>
    %23 = arith.truncf %1 : vector<4x512xf32> to vector<4x512xbf16>
    %24 = vector.extract_strided_slice %0 {offsets = [4, 0], sizes = [1, 512], strides = [1, 1]} : vector<9x512xbf16> to vector<1x512xbf16>
    %25 = vector.broadcast %24 : vector<1x512xbf16> to vector<4x512xbf16>
    %26 = arith.mulf %23, %25 : vector<4x512xbf16>
    %c511_i32 = arith.constant 511 : i32
    %27 = tpu.dynamic_rotate %1 by %c511_i32 dim 1 : vector<4x512xf32>, i32 -> vector<4x512xf32>
    %28 = arith.truncf %27 : vector<4x512xf32> to vector<4x512xbf16>
    %29 = vector.extract_strided_slice %0 {offsets = [5, 0], sizes = [1, 512], strides = [1, 1]} : vector<9x512xbf16> to vector<1x512xbf16>
    %30 = vector.broadcast %29 : vector<1x512xbf16> to vector<4x512xbf16>
    %31 = arith.mulf %28, %30 : vector<4x512xbf16>
    %c497_i32 = arith.constant 497 : i32
    %32 = tpu.dynamic_rotate %1 by %c497_i32 dim 1 : vector<4x512xf32>, i32 -> vector<4x512xf32>
    %33 = arith.truncf %32 : vector<4x512xf32> to vector<4x512xbf16>
    %34 = vector.extract_strided_slice %0 {offsets = [6, 0], sizes = [1, 512], strides = [1, 1]} : vector<9x512xbf16> to vector<1x512xbf16>
    %35 = vector.broadcast %34 : vector<1x512xbf16> to vector<4x512xbf16>
    %36 = arith.mulf %33, %35 : vector<4x512xbf16>
    %c496_i32 = arith.constant 496 : i32
    %37 = tpu.dynamic_rotate %1 by %c496_i32 dim 1 : vector<4x512xf32>, i32 -> vector<4x512xf32>
    %38 = arith.truncf %37 : vector<4x512xf32> to vector<4x512xbf16>
    %39 = vector.extract_strided_slice %0 {offsets = [7, 0], sizes = [1, 512], strides = [1, 1]} : vector<9x512xbf16> to vector<1x512xbf16>
    %40 = vector.broadcast %39 : vector<1x512xbf16> to vector<4x512xbf16>
    %41 = arith.mulf %38, %40 : vector<4x512xbf16>
    %c495_i32 = arith.constant 495 : i32
    %42 = tpu.dynamic_rotate %1 by %c495_i32 dim 1 : vector<4x512xf32>, i32 -> vector<4x512xf32>
    %43 = arith.truncf %42 : vector<4x512xf32> to vector<4x512xbf16>
    %44 = vector.extract_strided_slice %0 {offsets = [8, 0], sizes = [1, 512], strides = [1, 1]} : vector<9x512xbf16> to vector<1x512xbf16>
    %45 = vector.broadcast %44 : vector<1x512xbf16> to vector<4x512xbf16>
    %46 = arith.mulf %43, %45 : vector<4x512xbf16>
    %47 = tpu.concatenate %7, %12, %17, %22, %26, %31, %36, %41, %46 in 0 : vector<4x512xbf16>, vector<4x512xbf16>, vector<4x512xbf16>, vector<4x512xbf16>, vector<4x512xbf16>, vector<4x512xbf16>, vector<4x512xbf16>, vector<4x512xbf16>, vector<4x512xbf16> -> vector<36x512xbf16>
    %cst = arith.constant dense<0.000000e+00> : vector<4x512xf32>
    %48 = tpu.matmul %2, %47, %cst {dimension_numbers = #tpu.dot_dimension_numbers<[1], [0], [0], [1], [0, 0, 1, 1], [], []>} : vector<4x36xbf16>, vector<36x512xbf16>, vector<4x512xf32> -> vector<4x512xf32>
    %49 = vector.extract_strided_slice %48 {offsets = [0, 0], sizes = [4, 256], strides = [1, 1]} : vector<4x512xf32> to vector<4x256xf32>
    %cst_5 = arith.constant dense<0.000000e+00> : vector<4xf32>
    %50 = vector.multi_reduction <add>, %49, %cst_5 [1] : vector<4x256xf32> to vector<4xf32>
    %51 = vector.shape_cast %50 : vector<4xf32> to vector<4x1xf32>
    %cst_6 = arith.constant 2.560000e+02 : f32
    %52 = vector.broadcast %cst_6 : f32 to vector<4x1xf32>
    %53 = arith.divf %51, %52 : vector<4x1xf32>
    %54 = vector.broadcast %53 : vector<4x1xf32> to vector<4x256xf32>
    %55 = arith.subf %49, %54 : vector<4x256xf32>
    %56 = arith.mulf %55, %55 : vector<4x256xf32>
    %cst_7 = arith.constant dense<0.000000e+00> : vector<4xf32>
    %57 = vector.multi_reduction <add>, %56, %cst_7 [1] : vector<4x256xf32> to vector<4xf32>
    %58 = vector.shape_cast %57 : vector<4xf32> to vector<4x1xf32>
    %cst_8 = arith.constant 2.560000e+02 : f32
    %59 = vector.broadcast %cst_8 : f32 to vector<4x1xf32>
    %60 = arith.divf %58, %59 : vector<4x1xf32>
    %cst_9 = arith.constant 9.99999974E-6 : f32
    %61 = vector.broadcast %cst_9 : f32 to vector<4x1xf32>
    %62 = arith.addf %60, %61 : vector<4x1xf32>
    %63 = math.rsqrt %62 : vector<4x1xf32>
    %64 = vector.broadcast %63 : vector<4x1xf32> to vector<4x256xf32>
    %65 = arith.mulf %55, %64 : vector<4x256xf32>
    %cst_10 = arith.constant 0.000000e+00 : f32
    %66 = vector.broadcast %cst_10 : f32 to vector<4x256xf32>
    %67 = arith.maximumf %65, %66 : vector<4x256xf32>
    %68 = vector.extract_strided_slice %48 {offsets = [0, 256], sizes = [4, 256], strides = [1, 1]} : vector<4x512xf32> to vector<4x256xf32>
    %cst_11 = arith.constant dense<0.000000e+00> : vector<4xf32>
    %69 = vector.multi_reduction <add>, %68, %cst_11 [1] : vector<4x256xf32> to vector<4xf32>
    %70 = vector.shape_cast %69 : vector<4xf32> to vector<4x1xf32>
    %cst_12 = arith.constant 2.560000e+02 : f32
    %71 = vector.broadcast %cst_12 : f32 to vector<4x1xf32>
    %72 = arith.divf %70, %71 : vector<4x1xf32>
    %73 = vector.broadcast %72 : vector<4x1xf32> to vector<4x256xf32>
    %74 = arith.subf %68, %73 : vector<4x256xf32>
    %75 = arith.mulf %74, %74 : vector<4x256xf32>
    %cst_13 = arith.constant dense<0.000000e+00> : vector<4xf32>
    %76 = vector.multi_reduction <add>, %75, %cst_13 [1] : vector<4x256xf32> to vector<4xf32>
    %77 = vector.shape_cast %76 : vector<4xf32> to vector<4x1xf32>
    %cst_14 = arith.constant 2.560000e+02 : f32
    %78 = vector.broadcast %cst_14 : f32 to vector<4x1xf32>
    %79 = arith.divf %77, %78 : vector<4x1xf32>
    %cst_15 = arith.constant 9.99999974E-6 : f32
    %80 = vector.broadcast %cst_15 : f32 to vector<4x1xf32>
    %81 = arith.addf %79, %80 : vector<4x1xf32>
    %82 = math.rsqrt %81 : vector<4x1xf32>
    %83 = vector.broadcast %82 : vector<4x1xf32> to vector<4x256xf32>
    %84 = arith.mulf %74, %83 : vector<4x256xf32>
    %cst_16 = arith.constant 0.000000e+00 : f32
    %85 = vector.broadcast %cst_16 : f32 to vector<4x256xf32>
    %86 = arith.maximumf %84, %85 : vector<4x256xf32>
    %87 = tpu.concatenate %67, %86 in 1 : vector<4x256xf32>, vector<4x256xf32> -> vector<4x512xf32>
    %c0_17 = arith.constant 0 : index
    %c0_18 = arith.constant 0 : index
    %88 = vector.load %arg4[%c0_17, %c0_18] : memref<4x36xbf16, #tpu.memory_space<vmem>>, vector<4x36xbf16>
    %c17_i32_19 = arith.constant 17 : i32
    %89 = tpu.dynamic_rotate %87 by %c17_i32_19 dim 1 : vector<4x512xf32>, i32 -> vector<4x512xf32>
    %90 = arith.truncf %89 : vector<4x512xf32> to vector<4x512xbf16>
    %91 = vector.extract_strided_slice %0 {offsets = [0, 0], sizes = [1, 512], strides = [1, 1]} : vector<9x512xbf16> to vector<1x512xbf16>
    %92 = vector.broadcast %91 : vector<1x512xbf16> to vector<4x512xbf16>
    %93 = arith.mulf %90, %92 : vector<4x512xbf16>
    %c16_i32_20 = arith.constant 16 : i32
    %94 = tpu.dynamic_rotate %87 by %c16_i32_20 dim 1 : vector<4x512xf32>, i32 -> vector<4x512xf32>
    %95 = arith.truncf %94 : vector<4x512xf32> to vector<4x512xbf16>
    %96 = vector.extract_strided_slice %0 {offsets = [1, 0], sizes = [1, 512], strides = [1, 1]} : vector<9x512xbf16> to vector<1x512xbf16>
    %97 = vector.broadcast %96 : vector<1x512xbf16> to vector<4x512xbf16>
    %98 = arith.mulf %95, %97 : vector<4x512xbf16>
    %c15_i32_21 = arith.constant 15 : i32
    %99 = tpu.dynamic_rotate %87 by %c15_i32_21 dim 1 : vector<4x512xf32>, i32 -> vector<4x512xf32>
    %100 = arith.truncf %99 : vector<4x512xf32> to vector<4x512xbf16>
    %101 = vector.extract_strided_slice %0 {offsets = [2, 0], sizes = [1, 512], strides = [1, 1]} : vector<9x512xbf16> to vector<1x512xbf16>
    %102 = vector.broadcast %101 : vector<1x512xbf16> to vector<4x512xbf16>
    %103 = arith.mulf %100, %102 : vector<4x512xbf16>
    %c1_i32_22 = arith.constant 1 : i32
    %104 = tpu.dynamic_rotate %87 by %c1_i32_22 dim 1 : vector<4x512xf32>, i32 -> vector<4x512xf32>
    %105 = arith.truncf %104 : vector<4x512xf32> to vector<4x512xbf16>
    %106 = vector.extract_strided_slice %0 {offsets = [3, 0], sizes = [1, 512], strides = [1, 1]} : vector<9x512xbf16> to vector<1x512xbf16>
    %107 = vector.broadcast %106 : vector<1x512xbf16> to vector<4x512xbf16>
    %108 = arith.mulf %105, %107 : vector<4x512xbf16>
    %109 = arith.truncf %87 : vector<4x512xf32> to vector<4x512xbf16>
    %110 = vector.extract_strided_slice %0 {offsets = [4, 0], sizes = [1, 512], strides = [1, 1]} : vector<9x512xbf16> to vector<1x512xbf16>
    %111 = vector.broadcast %110 : vector<1x512xbf16> to vector<4x512xbf16>
    %112 = arith.mulf %109, %111 : vector<4x512xbf16>
    %c511_i32_23 = arith.constant 511 : i32
    %113 = tpu.dynamic_rotate %87 by %c511_i32_23 dim 1 : vector<4x512xf32>, i32 -> vector<4x512xf32>
    %114 = arith.truncf %113 : vector<4x512xf32> to vector<4x512xbf16>
    %115 = vector.extract_strided_slice %0 {offsets = [5, 0], sizes = [1, 512], strides = [1, 1]} : vector<9x512xbf16> to vector<1x512xbf16>
    %116 = vector.broadcast %115 : vector<1x512xbf16> to vector<4x512xbf16>
    %117 = arith.mulf %114, %116 : vector<4x512xbf16>
    %c497_i32_24 = arith.constant 497 : i32
    %118 = tpu.dynamic_rotate %87 by %c497_i32_24 dim 1 : vector<4x512xf32>, i32 -> vector<4x512xf32>
    %119 = arith.truncf %118 : vector<4x512xf32> to vector<4x512xbf16>
    %120 = vector.extract_strided_slice %0 {offsets = [6, 0], sizes = [1, 512], strides = [1, 1]} : vector<9x512xbf16> to vector<1x512xbf16>
    %121 = vector.broadcast %120 : vector<1x512xbf16> to vector<4x512xbf16>
    %122 = arith.mulf %119, %121 : vector<4x512xbf16>
    %c496_i32_25 = arith.constant 496 : i32
    %123 = tpu.dynamic_rotate %87 by %c496_i32_25 dim 1 : vector<4x512xf32>, i32 -> vector<4x512xf32>
    %124 = arith.truncf %123 : vector<4x512xf32> to vector<4x512xbf16>
    %125 = vector.extract_strided_slice %0 {offsets = [7, 0], sizes = [1, 512], strides = [1, 1]} : vector<9x512xbf16> to vector<1x512xbf16>
    %126 = vector.broadcast %125 : vector<1x512xbf16> to vector<4x512xbf16>
    %127 = arith.mulf %124, %126 : vector<4x512xbf16>
    %c495_i32_26 = arith.constant 495 : i32
    %128 = tpu.dynamic_rotate %87 by %c495_i32_26 dim 1 : vector<4x512xf32>, i32 -> vector<4x512xf32>
    %129 = arith.truncf %128 : vector<4x512xf32> to vector<4x512xbf16>
    %130 = vector.extract_strided_slice %0 {offsets = [8, 0], sizes = [1, 512], strides = [1, 1]} : vector<9x512xbf16> to vector<1x512xbf16>
    %131 = vector.broadcast %130 : vector<1x512xbf16> to vector<4x512xbf16>
    %132 = arith.mulf %129, %131 : vector<4x512xbf16>
    %133 = tpu.concatenate %93, %98, %103, %108, %112, %117, %122, %127, %132 in 0 : vector<4x512xbf16>, vector<4x512xbf16>, vector<4x512xbf16>, vector<4x512xbf16>, vector<4x512xbf16>, vector<4x512xbf16>, vector<4x512xbf16>, vector<4x512xbf16>, vector<4x512xbf16> -> vector<36x512xbf16>
    %cst_27 = arith.constant dense<0.000000e+00> : vector<4x512xf32>
    %134 = tpu.matmul %88, %133, %cst_27 {dimension_numbers = #tpu.dot_dimension_numbers<[1], [0], [0], [1], [0, 0, 1, 1], [], []>} : vector<4x36xbf16>, vector<36x512xbf16>, vector<4x512xf32> -> vector<4x512xf32>
    %135 = vector.extract_strided_slice %134 {offsets = [0, 0], sizes = [4, 256], strides = [1, 1]} : vector<4x512xf32> to vector<4x256xf32>
    %cst_28 = arith.constant dense<0.000000e+00> : vector<4xf32>
    %136 = vector.multi_reduction <add>, %135, %cst_28 [1] : vector<4x256xf32> to vector<4xf32>
    %137 = vector.shape_cast %136 : vector<4xf32> to vector<4x1xf32>
    %cst_29 = arith.constant 2.560000e+02 : f32
    %138 = vector.broadcast %cst_29 : f32 to vector<4x1xf32>
    %139 = arith.divf %137, %138 : vector<4x1xf32>
    %140 = vector.broadcast %139 : vector<4x1xf32> to vector<4x256xf32>
    %141 = arith.subf %135, %140 : vector<4x256xf32>
    %142 = arith.mulf %141, %141 : vector<4x256xf32>
    %cst_30 = arith.constant dense<0.000000e+00> : vector<4xf32>
    %143 = vector.multi_reduction <add>, %142, %cst_30 [1] : vector<4x256xf32> to vector<4xf32>
    %144 = vector.shape_cast %143 : vector<4xf32> to vector<4x1xf32>
    %cst_31 = arith.constant 2.560000e+02 : f32
    %145 = vector.broadcast %cst_31 : f32 to vector<4x1xf32>
    %146 = arith.divf %144, %145 : vector<4x1xf32>
    %cst_32 = arith.constant 9.99999974E-6 : f32
    %147 = vector.broadcast %cst_32 : f32 to vector<4x1xf32>
    %148 = arith.addf %146, %147 : vector<4x1xf32>
    %149 = math.rsqrt %148 : vector<4x1xf32>
    %150 = vector.broadcast %149 : vector<4x1xf32> to vector<4x256xf32>
    %151 = arith.mulf %141, %150 : vector<4x256xf32>
    %cst_33 = arith.constant 0.000000e+00 : f32
    %152 = vector.broadcast %cst_33 : f32 to vector<4x256xf32>
    %153 = arith.maximumf %151, %152 : vector<4x256xf32>
    %154 = vector.extract_strided_slice %134 {offsets = [0, 256], sizes = [4, 256], strides = [1, 1]} : vector<4x512xf32> to vector<4x256xf32>
    %cst_34 = arith.constant dense<0.000000e+00> : vector<4xf32>
    %155 = vector.multi_reduction <add>, %154, %cst_34 [1] : vector<4x256xf32> to vector<4xf32>
    %156 = vector.shape_cast %155 : vector<4xf32> to vector<4x1xf32>
    %cst_35 = arith.constant 2.560000e+02 : f32
    %157 = vector.broadcast %cst_35 : f32 to vector<4x1xf32>
    %158 = arith.divf %156, %157 : vector<4x1xf32>
    %159 = vector.broadcast %158 : vector<4x1xf32> to vector<4x256xf32>
    %160 = arith.subf %154, %159 : vector<4x256xf32>
    %161 = arith.mulf %160, %160 : vector<4x256xf32>
    %cst_36 = arith.constant dense<0.000000e+00> : vector<4xf32>
    %162 = vector.multi_reduction <add>, %161, %cst_36 [1] : vector<4x256xf32> to vector<4xf32>
    %163 = vector.shape_cast %162 : vector<4xf32> to vector<4x1xf32>
    %cst_37 = arith.constant 2.560000e+02 : f32
    %164 = vector.broadcast %cst_37 : f32 to vector<4x1xf32>
    %165 = arith.divf %163, %164 : vector<4x1xf32>
    %cst_38 = arith.constant 9.99999974E-6 : f32
    %166 = vector.broadcast %cst_38 : f32 to vector<4x1xf32>
    %167 = arith.addf %165, %166 : vector<4x1xf32>
    %168 = math.rsqrt %167 : vector<4x1xf32>
    %169 = vector.broadcast %168 : vector<4x1xf32> to vector<4x256xf32>
    %170 = arith.mulf %160, %169 : vector<4x256xf32>
    %cst_39 = arith.constant 0.000000e+00 : f32
    %171 = vector.broadcast %cst_39 : f32 to vector<4x256xf32>
    %172 = arith.maximumf %170, %171 : vector<4x256xf32>
    %173 = tpu.concatenate %153, %172 in 1 : vector<4x256xf32>, vector<4x256xf32> -> vector<4x512xf32>
    %c0_40 = arith.constant 0 : index
    %c0_41 = arith.constant 0 : index
    %174 = vector.load %arg5[%c0_40, %c0_41] : memref<8x36xbf16, #tpu.memory_space<vmem>>, vector<8x36xbf16>
    %c17_i32_42 = arith.constant 17 : i32
    %175 = tpu.dynamic_rotate %173 by %c17_i32_42 dim 1 : vector<4x512xf32>, i32 -> vector<4x512xf32>
    %176 = arith.truncf %175 : vector<4x512xf32> to vector<4x512xbf16>
    %177 = vector.extract_strided_slice %0 {offsets = [0, 0], sizes = [1, 512], strides = [1, 1]} : vector<9x512xbf16> to vector<1x512xbf16>
    %178 = vector.broadcast %177 : vector<1x512xbf16> to vector<4x512xbf16>
    %179 = arith.mulf %176, %178 : vector<4x512xbf16>
    %c16_i32_43 = arith.constant 16 : i32
    %180 = tpu.dynamic_rotate %173 by %c16_i32_43 dim 1 : vector<4x512xf32>, i32 -> vector<4x512xf32>
    %181 = arith.truncf %180 : vector<4x512xf32> to vector<4x512xbf16>
    %182 = vector.extract_strided_slice %0 {offsets = [1, 0], sizes = [1, 512], strides = [1, 1]} : vector<9x512xbf16> to vector<1x512xbf16>
    %183 = vector.broadcast %182 : vector<1x512xbf16> to vector<4x512xbf16>
    %184 = arith.mulf %181, %183 : vector<4x512xbf16>
    %c15_i32_44 = arith.constant 15 : i32
    %185 = tpu.dynamic_rotate %173 by %c15_i32_44 dim 1 : vector<4x512xf32>, i32 -> vector<4x512xf32>
    %186 = arith.truncf %185 : vector<4x512xf32> to vector<4x512xbf16>
    %187 = vector.extract_strided_slice %0 {offsets = [2, 0], sizes = [1, 512], strides = [1, 1]} : vector<9x512xbf16> to vector<1x512xbf16>
    %188 = vector.broadcast %187 : vector<1x512xbf16> to vector<4x512xbf16>
    %189 = arith.mulf %186, %188 : vector<4x512xbf16>
    %c1_i32_45 = arith.constant 1 : i32
    %190 = tpu.dynamic_rotate %173 by %c1_i32_45 dim 1 : vector<4x512xf32>, i32 -> vector<4x512xf32>
    %191 = arith.truncf %190 : vector<4x512xf32> to vector<4x512xbf16>
    %192 = vector.extract_strided_slice %0 {offsets = [3, 0], sizes = [1, 512], strides = [1, 1]} : vector<9x512xbf16> to vector<1x512xbf16>
    %193 = vector.broadcast %192 : vector<1x512xbf16> to vector<4x512xbf16>
    %194 = arith.mulf %191, %193 : vector<4x512xbf16>
    %195 = arith.truncf %173 : vector<4x512xf32> to vector<4x512xbf16>
    %196 = vector.extract_strided_slice %0 {offsets = [4, 0], sizes = [1, 512], strides = [1, 1]} : vector<9x512xbf16> to vector<1x512xbf16>
    %197 = vector.broadcast %196 : vector<1x512xbf16> to vector<4x512xbf16>
    %198 = arith.mulf %195, %197 : vector<4x512xbf16>
    %c511_i32_46 = arith.constant 511 : i32
    %199 = tpu.dynamic_rotate %173 by %c511_i32_46 dim 1 : vector<4x512xf32>, i32 -> vector<4x512xf32>
    %200 = arith.truncf %199 : vector<4x512xf32> to vector<4x512xbf16>
    %201 = vector.extract_strided_slice %0 {offsets = [5, 0], sizes = [1, 512], strides = [1, 1]} : vector<9x512xbf16> to vector<1x512xbf16>
    %202 = vector.broadcast %201 : vector<1x512xbf16> to vector<4x512xbf16>
    %203 = arith.mulf %200, %202 : vector<4x512xbf16>
    %c497_i32_47 = arith.constant 497 : i32
    %204 = tpu.dynamic_rotate %173 by %c497_i32_47 dim 1 : vector<4x512xf32>, i32 -> vector<4x512xf32>
    %205 = arith.truncf %204 : vector<4x512xf32> to vector<4x512xbf16>
    %206 = vector.extract_strided_slice %0 {offsets = [6, 0], sizes = [1, 512], strides = [1, 1]} : vector<9x512xbf16> to vector<1x512xbf16>
    %207 = vector.broadcast %206 : vector<1x512xbf16> to vector<4x512xbf16>
    %208 = arith.mulf %205, %207 : vector<4x512xbf16>
    %c496_i32_48 = arith.constant 496 : i32
    %209 = tpu.dynamic_rotate %173 by %c496_i32_48 dim 1 : vector<4x512xf32>, i32 -> vector<4x512xf32>
    %210 = arith.truncf %209 : vector<4x512xf32> to vector<4x512xbf16>
    %211 = vector.extract_strided_slice %0 {offsets = [7, 0], sizes = [1, 512], strides = [1, 1]} : vector<9x512xbf16> to vector<1x512xbf16>
    %212 = vector.broadcast %211 : vector<1x512xbf16> to vector<4x512xbf16>
    %213 = arith.mulf %210, %212 : vector<4x512xbf16>
    %c495_i32_49 = arith.constant 495 : i32
    %214 = tpu.dynamic_rotate %173 by %c495_i32_49 dim 1 : vector<4x512xf32>, i32 -> vector<4x512xf32>
    %215 = arith.truncf %214 : vector<4x512xf32> to vector<4x512xbf16>
    %216 = vector.extract_strided_slice %0 {offsets = [8, 0], sizes = [1, 512], strides = [1, 1]} : vector<9x512xbf16> to vector<1x512xbf16>
    %217 = vector.broadcast %216 : vector<1x512xbf16> to vector<4x512xbf16>
    %218 = arith.mulf %215, %217 : vector<4x512xbf16>
    %219 = tpu.concatenate %179, %184, %189, %194, %198, %203, %208, %213, %218 in 0 : vector<4x512xbf16>, vector<4x512xbf16>, vector<4x512xbf16>, vector<4x512xbf16>, vector<4x512xbf16>, vector<4x512xbf16>, vector<4x512xbf16>, vector<4x512xbf16>, vector<4x512xbf16> -> vector<36x512xbf16>
    %cst_50 = arith.constant dense<0.000000e+00> : vector<8x512xf32>
    %220 = tpu.matmul %174, %219, %cst_50 {dimension_numbers = #tpu.dot_dimension_numbers<[1], [0], [0], [1], [0, 0, 1, 1], [], []>} : vector<8x36xbf16>, vector<36x512xbf16>, vector<8x512xf32> -> vector<8x512xf32>
    %221 = arith.truncf %220 : vector<8x512xf32> to vector<8x512xbf16>
    %c0_51 = arith.constant 0 : index
    %c0_52 = arith.constant 0 : index
    %222 = vector.load %arg6[%c0_51, %c0_52] : memref<512x128xbf16, #tpu.memory_space<vmem>>, vector<512x128xbf16>
    %cst_53 = arith.constant dense<0.000000e+00> : vector<8x128xf32>
    %223 = tpu.matmul %221, %222, %cst_53 {dimension_numbers = #tpu.dot_dimension_numbers<[1], [0], [0], [1], [0, 0, 1, 1], [], []>} : vector<8x512xbf16>, vector<512x128xbf16>, vector<8x128xf32> -> vector<8x128xf32>
    %224 = vector.extract_strided_slice %223 {offsets = [0, 0], sizes = [8, 64], strides = [1, 1]} : vector<8x128xf32> to vector<8x64xf32>
    %cst_54 = arith.constant dense<0.000000e+00> : vector<8xf32>
    %225 = vector.multi_reduction <add>, %224, %cst_54 [1] : vector<8x64xf32> to vector<8xf32>
    %226 = vector.shape_cast %225 : vector<8xf32> to vector<8x1xf32>
    %cst_55 = arith.constant 6.400000e+01 : f32
    %227 = vector.broadcast %cst_55 : f32 to vector<8x1xf32>
    %228 = arith.divf %226, %227 : vector<8x1xf32>
    %229 = vector.broadcast %228 : vector<8x1xf32> to vector<8x64xf32>
    %230 = arith.subf %224, %229 : vector<8x64xf32>
    %231 = arith.mulf %230, %230 : vector<8x64xf32>
    %cst_56 = arith.constant dense<0.000000e+00> : vector<8xf32>
    %232 = vector.multi_reduction <add>, %231, %cst_56 [1] : vector<8x64xf32> to vector<8xf32>
    %233 = vector.shape_cast %232 : vector<8xf32> to vector<8x1xf32>
    %cst_57 = arith.constant 6.400000e+01 : f32
    %234 = vector.broadcast %cst_57 : f32 to vector<8x1xf32>
    %235 = arith.divf %233, %234 : vector<8x1xf32>
    %cst_58 = arith.constant 9.99999974E-6 : f32
    %236 = vector.broadcast %cst_58 : f32 to vector<8x1xf32>
    %237 = arith.addf %235, %236 : vector<8x1xf32>
    %238 = math.rsqrt %237 : vector<8x1xf32>
    %239 = vector.broadcast %238 : vector<8x1xf32> to vector<8x64xf32>
    %240 = arith.mulf %230, %239 : vector<8x64xf32>
    %cst_59 = arith.constant 0.000000e+00 : f32
    %241 = vector.broadcast %cst_59 : f32 to vector<8x64xf32>
    %242 = arith.maximumf %240, %241 : vector<8x64xf32>
    %243 = vector.extract_strided_slice %223 {offsets = [0, 64], sizes = [8, 64], strides = [1, 1]} : vector<8x128xf32> to vector<8x64xf32>
    %cst_60 = arith.constant dense<0.000000e+00> : vector<8xf32>
    %244 = vector.multi_reduction <add>, %243, %cst_60 [1] : vector<8x64xf32> to vector<8xf32>
    %245 = vector.shape_cast %244 : vector<8xf32> to vector<8x1xf32>
    %cst_61 = arith.constant 6.400000e+01 : f32
    %246 = vector.broadcast %cst_61 : f32 to vector<8x1xf32>
    %247 = arith.divf %245, %246 : vector<8x1xf32>
    %248 = vector.broadcast %247 : vector<8x1xf32> to vector<8x64xf32>
    %249 = arith.subf %243, %248 : vector<8x64xf32>
    %250 = arith.mulf %249, %249 : vector<8x64xf32>
    %cst_62 = arith.constant dense<0.000000e+00> : vector<8xf32>
    %251 = vector.multi_reduction <add>, %250, %cst_62 [1] : vector<8x64xf32> to vector<8xf32>
    %252 = vector.shape_cast %251 : vector<8xf32> to vector<8x1xf32>
    %cst_63 = arith.constant 6.400000e+01 : f32
    %253 = vector.broadcast %cst_63 : f32 to vector<8x1xf32>
    %254 = arith.divf %252, %253 : vector<8x1xf32>
    %cst_64 = arith.constant 9.99999974E-6 : f32
    %255 = vector.broadcast %cst_64 : f32 to vector<8x1xf32>
    %256 = arith.addf %254, %255 : vector<8x1xf32>
    %257 = math.rsqrt %256 : vector<8x1xf32>
    %258 = vector.broadcast %257 : vector<8x1xf32> to vector<8x64xf32>
    %259 = arith.mulf %249, %258 : vector<8x64xf32>
    %cst_65 = arith.constant 0.000000e+00 : f32
    %260 = vector.broadcast %cst_65 : f32 to vector<8x64xf32>
    %261 = arith.maximumf %259, %260 : vector<8x64xf32>
    %262 = tpu.concatenate %242, %261 in 1 : vector<8x64xf32>, vector<8x64xf32> -> vector<8x128xf32>
    %c0_66 = arith.constant 0 : index
    %c0_67 = arith.constant 0 : index
    %263 = vector.load %arg7[%c0_66, %c0_67] : memref<8x128xf32, #tpu.memory_space<vmem>>, vector<8x128xf32>
    tpu.vector_store %arg7[%c0_66, %c0_67], %262 {strides = array<i32>} : memref<8x128xf32, #tpu.memory_space<vmem>>, vector<8x128xf32>,
    return
  }
  func.func @transform_0(%arg0: i32) -> (i32, i32) {
    %c0_i32 = arith.constant 0 : i32
    %c0_i32_0 = arith.constant 0 : i32
    %c0_i32_1 = arith.constant 0 : i32
    return %c0_i32, %c0_i32_0 : i32, i32
  }
  func.func @transform_1(%arg0: i32) -> (i32, i32) {
    %c0_i32 = arith.constant 0 : i32
    %c0_i32_0 = arith.constant 0 : i32
    %c0_i32_1 = arith.constant 0 : i32
    return %c0_i32, %c0_i32_0 : i32, i32
  }
  func.func @transform_2(%arg0: i32) -> (i32, i32) {
    %c0_i32 = arith.constant 0 : i32
    %c0_i32_0 = arith.constant 0 : i32
    %c0_i32_1 = arith.constant 0 : i32
    return %c0_i32, %c0_i32_0 : i32, i32
  }
  func.func @transform_3(%arg0: i32) -> (i32, i32) {
    %c0_i32 = arith.constant 0 : i32
    %c0_i32_0 = arith.constant 0 : i32
    %c0_i32_1 = arith.constant 0 : i32
    return %c0_i32, %c0_i32_0 : i32, i32
  }
  func.func @transform_4(%arg0: i32) -> (i32, i32) {
    %c0_i32 = arith.constant 0 : i32
    %c0_i32_0 = arith.constant 0 : i32
    %c0_i32_1 = arith.constant 0 : i32
    return %c0_i32, %c0_i32_0 : i32, i32
  }
  func.func @transform_5(%arg0: i32) -> (i32, i32) {
    %c0_i32 = arith.constant 0 : i32
    %c0_i32_0 = arith.constant 0 : i32
    %c0_i32_1 = arith.constant 0 : i32
    return %c0_i32, %c0_i32_0 : i32, i32
  }
  func.func @transform_6(%arg0: i32) -> (i32, i32) {
    %c0_i32 = arith.constant 0 : i32
    %c0_i32_0 = arith.constant 0 : i32
    %c0_i32_1 = arith.constant 0 : i32
    return %c0_i32, %c0_i32_0 : i32, i32
  }
}

</mosaic_0001>

<llo_original>
// kernel: down_conv_block.1
$region0: #{down_conv_block.1}
  #allocation0 [shape = 'u32[]', space=smem, size = 0x4, offset = 0x4, fixed_abs, tag = 'smem constant byte address 0x4 - core index']
  #allocation1 [shape = 'u32[72,128]{1,0:T(1,128)}', space=vmem, size = 0x9000, scoped, tag = 'internal scratch']
  %s0 = inlined_call_operand.vmem [shape: f32[4,512], index: 0, kind: input, shape index: {}]
  %s1 = inlined_call_operand.vmem [shape: bf16[9,512], index: 1, kind: input, shape index: {}]
  %s2 = inlined_call_operand.vmem [shape: bf16[4,36], index: 2, kind: input, shape index: {}]
  %s3 = inlined_call_operand.vmem [shape: bf16[4,36], index: 3, kind: input, shape index: {}]
  %s4 = inlined_call_operand.vmem [shape: bf16[8,36], index: 4, kind: input, shape index: {}]
  %s5 = inlined_call_operand.vmem [shape: bf16[512,128], index: 5, kind: input, shape index: {}]
  %s6 = inlined_call_operand.vmem [shape: f32[8,128], index: 6, kind: output, shape index: {}]
  %s7 = sld [smem:[#allocation0]]
  $region34: #{down_conv_block.1} parent=0
    _
  %s9 = ssub.s32 1, %s7
  %s10 = scalar_select 0, %s9, %s7
  // Predicated region
  $region2: #{down_conv_block.1} parent=0 // pred_check
    _
  $region3: #{down_conv_block.1} parent=0 // pred_check_branch
    %12 = sbr.rel (0) target = $region5
  $region4: #{down_conv_block.1} parent=0 // pred_region
    _
  $region5: #{down_conv_block.1} parent=0 // pred_fallthru
    _
  // Predicated region
  $region6: #{down_conv_block.1} parent=0 // pred_check
    _
  $region7: #{down_conv_block.1} parent=0 // pred_check_branch
    %14 = sbr.rel (0) target = $region9
  $region8: #{down_conv_block.1} parent=0 // pred_region
    _
  $region9: #{down_conv_block.1} parent=0 // pred_fallthru
    _
  // Predicated region
  $region10: #{down_conv_block.1} parent=0 // pred_check
    _
  $region11: #{down_conv_block.1} parent=0 // pred_check_branch
    %16 = sbr.rel (0) target = $region13
  $region12: #{down_conv_block.1} parent=0 // pred_region
    _
  $region13: #{down_conv_block.1} parent=0 // pred_fallthru
    _
  // Predicated region
  $region14: #{down_conv_block.1} parent=0 // pred_check
    _
  $region15: #{down_conv_block.1} parent=0 // pred_check_branch
    %18 = sbr.rel (0) target = $region17
  $region16: #{down_conv_block.1} parent=0 // pred_region
    _
  $region17: #{down_conv_block.1} parent=0 // pred_fallthru
    _
  // Predicated region
  $region18: #{down_conv_block.1} parent=0 // pred_check
    _
  $region19: #{down_conv_block.1} parent=0 // pred_check_branch
    %20 = sbr.rel (0) target = $region21
  $region20: #{down_conv_block.1} parent=0 // pred_region
    _
  $region21: #{down_conv_block.1} parent=0 // pred_fallthru
    _
  // Predicated region
  $region22: #{down_conv_block.1} parent=0 // pred_check
    _
  $region23: #{down_conv_block.1} parent=0 // pred_check_branch
    %22 = sbr.rel (0) target = $region25
  $region24: #{down_conv_block.1} parent=0 // pred_region
    _
  $region25: #{down_conv_block.1} parent=0 // pred_fallthru
    _
  %v24 = vld [vmem:[%s1] sm:$0xff]
  %v25 = vld [vmem:[%s1 + $0x8] sm:$0xff]
  %v26 = vld [vmem:[%s1 + $0x10] sm:$0x11]
  %v27 = vld [vmem:[%s1 + $0x18] sm:$0x11]
  %v28 = vld [vmem:[%s0] sm:$0xff]
  %v29 = vld [vmem:[%s0 + $0x8] sm:$0xff]
  %v30 = vld [vmem:[%s2] sm:$0x3]
  %33 = vst [vmem:[#allocation1] ss:$2 sm:$0xff] %v28
  %s34 = scalar_lea.vmem [#allocation1], 16
  %35 = vst [vmem:[%s34] ss:$2 sm:$0xff] %v29
  %v36 = vld.sshfl [vmem:[#allocation1] sm:$0xff pattern:$0x75316420]
  %v37 = vld.sshfl [vmem:[#allocation1 + $0x8] sm:$0xff pattern:$0x75316420]
  %v38 = vld.sshfl [vmem:[#allocation1 + $0x10] sm:$0xff pattern:$0x75316420]
  %v39 = vld.sshfl [vmem:[#allocation1 + $0x18] sm:$0xff pattern:$0x75316420]
  %44 = vrot.lane.b32.xlu0 %v36, 17
  %v45 = vpop.permute.xlu0 %44
  %46 = vrot.lane.b32.xlu0 %v37, 17
  %v47 = vpop.permute.xlu0 %46
  %48 = vrot.lane.b32.xlu0 %v38, 17
  %v49 = vpop.permute.xlu0 %48
  %50 = vrot.lane.b32.xlu0 %v39, 17
  %v51 = vpop.permute.xlu0 %50
  %v52 = vlaneseq
  %v53 = vand.u32 %v52, 127
  %vm54 = vcmp.lt.s32.totalorder %v53, 17
  %v55 = vsel %vm54, %v49, %v51
  %v56 = vsel %vm54, %v47, %v49
  %v57 = vsel %vm54, %v45, %v47
  %v58 = vsel %vm54, %v51, %v45
  %v59 = vpack.c.bf16 %v57, %v58
  %v60 = vpack.c.bf16 %v55, %v56
  %v63 = vunpack.c.l.b16 %v24
  %v64 = vunpack.c.h.b16 %v24
  %v65 = vunpack.c.l.b16 %v25
  %v66 = vunpack.c.h.b16 %v25
  %v67 = vpack.c.b16 %v63, %v63
  %v68 = vpack.c.b16 %v64, %v64
  %v69 = vpack.c.b16 %v65, %v65
  %v70 = vpack.c.b16 %v66, %v66
  %v72 = vpack.i.b16 %v67, %v67
  %v74 = vperm.slane %v72, 0
  %v76 = vpack.i.b16 %v68, %v68
  %v78 = vperm.slane %v76, 0
  %v80 = vpack.i.b16 %v69, %v69
  %v82 = vperm.slane %v80, 0
  %v84 = vpack.i.b16 %v70, %v70
  %v86 = vperm.slane %v84, 0
  %v87 = vunpack.c.l.bf16 %v59
  %v88 = vunpack.c.h.bf16 %v59
  %v89 = vunpack.c.l.bf16 %v60
  %v90 = vunpack.c.h.bf16 %v60
  %v91 = vunpack.c.l.bf16 %v74
  %v92 = vunpack.c.l.bf16 %v78
  %v93 = vunpack.c.l.bf16 %v82
  %v94 = vunpack.c.l.bf16 %v86
  %v95 = vmul.f32 %v87, %v91
  %v96 = vmul.f32 %v88, %v92
  %v97 = vmul.f32 %v89, %v93
  %v98 = vmul.f32 %v90, %v94
  %v99 = vpack.c.bf16 %v96, %v95
  %v100 = vpack.c.bf16 %v98, %v97
  %101 = vst [vmem:[#allocation1] ss:$2 sm:$0xff] %v28
  %s102 = scalar_lea.vmem [#allocation1], 16
  %103 = vst [vmem:[%s102] ss:$2 sm:$0xff] %v29
  %v104 = vld.sshfl [vmem:[#allocation1] sm:$0xff pattern:$0x75316420]
  %v105 = vld.sshfl [vmem:[#allocation1 + $0x8] sm:$0xff pattern:$0x75316420]
  %v106 = vld.sshfl [vmem:[#allocation1 + $0x10] sm:$0xff pattern:$0x75316420]
  %v107 = vld.sshfl [vmem:[#allocation1 + $0x18] sm:$0xff pattern:$0x75316420]
  %112 = vrot.lane.b32.xlu0 %v104, 16
  %v113 = vpop.permute.xlu0 %112
  %114 = vrot.lane.b32.xlu0 %v105, 16
  %v115 = vpop.permute.xlu0 %114
  %116 = vrot.lane.b32.xlu0 %v106, 16
  %v117 = vpop.permute.xlu0 %116
  %118 = vrot.lane.b32.xlu0 %v107, 16
  %v119 = vpop.permute.xlu0 %118
  %vm120 = vcmp.lt.s32.totalorder %v53, 16
  %v121 = vsel %vm120, %v117, %v119
  %v122 = vsel %vm120, %v115, %v117
  %v123 = vsel %vm120, %v113, %v115
  %v124 = vsel %vm120, %v119, %v113
  %v125 = vpack.c.bf16 %v123, %v124
  %v126 = vpack.c.bf16 %v121, %v122
  %v127 = vshrl.u32 %v67, 16
  %v128 = vpack.i.b16 %v127, %v127
  %v130 = vperm.slane %v128, 0
  %v131 = vshrl.u32 %v68, 16
  %v132 = vpack.i.b16 %v131, %v131
  %v134 = vperm.slane %v132, 0
  %v135 = vshrl.u32 %v69, 16
  %v136 = vpack.i.b16 %v135, %v135
  %v138 = vperm.slane %v136, 0
  %v139 = vshrl.u32 %v70, 16
  %v140 = vpack.i.b16 %v139, %v139
  %v142 = vperm.slane %v140, 0
  %v143 = vunpack.c.l.bf16 %v125
  %v144 = vunpack.c.h.bf16 %v125
  %v145 = vunpack.c.l.bf16 %v126
  %v146 = vunpack.c.h.bf16 %v126
  %v147 = vunpack.c.l.bf16 %v130
  %v148 = vunpack.c.l.bf16 %v134
  %v149 = vunpack.c.l.bf16 %v138
  %v150 = vunpack.c.l.bf16 %v142
  %v151 = vmul.f32 %v143, %v147
  %v152 = vmul.f32 %v144, %v148
  %v153 = vmul.f32 %v145, %v149
  %v154 = vmul.f32 %v146, %v150
  %v155 = vpack.c.bf16 %v152, %v151
  %v156 = vpack.c.bf16 %v154, %v153
  %157 = vst [vmem:[#allocation1] ss:$2 sm:$0xff] %v28
  %s158 = scalar_lea.vmem [#allocation1], 16
  %159 = vst [vmem:[%s158] ss:$2 sm:$0xff] %v29
  %v160 = vld.sshfl [vmem:[#allocation1] sm:$0xff pattern:$0x75316420]
  %v161 = vld.sshfl [vmem:[#allocation1 + $0x8] sm:$0xff pattern:$0x75316420]
  %v162 = vld.sshfl [vmem:[#allocation1 + $0x10] sm:$0xff pattern:$0x75316420]
  %v163 = vld.sshfl [vmem:[#allocation1 + $0x18] sm:$0xff pattern:$0x75316420]
  %168 = vrot.lane.b32.xlu0 %v160, 15
  %v169 = vpop.permute.xlu0 %168
  %170 = vrot.lane.b32.xlu0 %v161, 15
  %v171 = vpop.permute.xlu0 %170
  %172 = vrot.lane.b32.xlu0 %v162, 15
  %v173 = vpop.permute.xlu0 %172
  %174 = vrot.lane.b32.xlu0 %v163, 15
  %v175 = vpop.permute.xlu0 %174
  %vm176 = vcmp.lt.s32.totalorder %v53, 15
  %v177 = vsel %vm176, %v173, %v175
  %v178 = vsel %vm176, %v171, %v173
  %v179 = vsel %vm176, %v169, %v171
  %v180 = vsel %vm176, %v175, %v169
  %v181 = vpack.c.bf16 %v179, %v180
  %v182 = vpack.c.bf16 %v177, %v178
  %v183 = vperm.slane %v72, 1
  %v184 = vperm.slane %v76, 1
  %v185 = vperm.slane %v80, 1
  %v186 = vperm.slane %v84, 1
  %v187 = vunpack.c.l.bf16 %v181
  %v188 = vunpack.c.h.bf16 %v181
  %v189 = vunpack.c.l.bf16 %v182
  %v190 = vunpack.c.h.bf16 %v182
  %v191 = vunpack.c.l.bf16 %v183
  %v192 = vunpack.c.l.bf16 %v184
  %v193 = vunpack.c.l.bf16 %v185
  %v194 = vunpack.c.l.bf16 %v186
  %v195 = vmul.f32 %v187, %v191
  %v196 = vmul.f32 %v188, %v192
  %v197 = vmul.f32 %v189, %v193
  %v198 = vmul.f32 %v190, %v194
  %v199 = vpack.c.bf16 %v196, %v195
  %v200 = vpack.c.bf16 %v198, %v197
  %201 = vst [vmem:[#allocation1] ss:$2 sm:$0xff] %v28
  %s202 = scalar_lea.vmem [#allocation1], 16
  %203 = vst [vmem:[%s202] ss:$2 sm:$0xff] %v29
  %v204 = vld.sshfl [vmem:[#allocation1] sm:$0xff pattern:$0x75316420]
  %v205 = vld.sshfl [vmem:[#allocation1 + $0x8] sm:$0xff pattern:$0x75316420]
  %v206 = vld.sshfl [vmem:[#allocation1 + $0x10] sm:$0xff pattern:$0x75316420]
  %v207 = vld.sshfl [vmem:[#allocation1 + $0x18] sm:$0xff pattern:$0x75316420]
  %212 = vrot.lane.b32.xlu0 %v204, 1
  %v213 = vpop.permute.xlu0 %212
  %214 = vrot.lane.b32.xlu0 %v205, 1
  %v215 = vpop.permute.xlu0 %214
  %216 = vrot.lane.b32.xlu0 %v206, 1
  %v217 = vpop.permute.xlu0 %216
  %218 = vrot.lane.b32.xlu0 %v207, 1
  %v219 = vpop.permute.xlu0 %218
  %vm220 = vcmp.lt.s32.totalorder %v53, 1
  %v221 = vsel %vm220, %v217, %v219
  %v222 = vsel %vm220, %v215, %v217
  %v223 = vsel %vm220, %v213, %v215
  %v224 = vsel %vm220, %v219, %v213
  %v225 = vpack.c.bf16 %v223, %v224
  %v226 = vpack.c.bf16 %v221, %v222
  %v227 = vperm.slane %v128, 1
  %v228 = vperm.slane %v132, 1
  %v229 = vperm.slane %v136, 1
  %v230 = vperm.slane %v140, 1
  %v231 = vunpack.c.l.bf16 %v225
  %v232 = vunpack.c.h.bf16 %v225
  %v233 = vunpack.c.l.bf16 %v226
  %v234 = vunpack.c.h.bf16 %v226
  %v235 = vunpack.c.l.bf16 %v227
  %v236 = vunpack.c.l.bf16 %v228
  %v237 = vunpack.c.l.bf16 %v229
  %v238 = vunpack.c.l.bf16 %v230
  %v239 = vmul.f32 %v231, %v235
  %v240 = vmul.f32 %v232, %v236
  %v241 = vmul.f32 %v233, %v237
  %v242 = vmul.f32 %v234, %v238
  %v243 = vpack.c.bf16 %v240, %v239
  %v244 = vpack.c.bf16 %v242, %v241
  %245 = vst [vmem:[#allocation1] ss:$2 sm:$0xff] %v28
  %s246 = scalar_lea.vmem [#allocation1], 16
  %247 = vst [vmem:[%s246] ss:$2 sm:$0xff] %v29
  %v248 = vld.sshfl [vmem:[#allocation1] sm:$0xff pattern:$0x75316420]
  %v249 = vld.sshfl [vmem:[#allocation1 + $0x8] sm:$0xff pattern:$0x75316420]
  %v250 = vld.sshfl [vmem:[#allocation1 + $0x10] sm:$0xff pattern:$0x75316420]
  %v251 = vld.sshfl [vmem:[#allocation1 + $0x18] sm:$0xff pattern:$0x75316420]
  %v256 = vpack.c.bf16 %v249, %v248
  %v257 = vpack.c.bf16 %v251, %v250
  %v258 = vperm.slane %v72, 2
  %v259 = vperm.slane %v76, 2
  %v260 = vperm.slane %v80, 2
  %v261 = vperm.slane %v84, 2
  %v262 = vunpack.c.l.bf16 %v256
  %v263 = vunpack.c.h.bf16 %v256
  %v264 = vunpack.c.l.bf16 %v257
  %v265 = vunpack.c.h.bf16 %v257
  %v266 = vunpack.c.l.bf16 %v258
  %v267 = vunpack.c.l.bf16 %v259
  %v268 = vunpack.c.l.bf16 %v260
  %v269 = vunpack.c.l.bf16 %v261
  %v270 = vmul.f32 %v262, %v266
  %v271 = vmul.f32 %v263, %v267
  %v272 = vmul.f32 %v264, %v268
  %v273 = vmul.f32 %v265, %v269
  %v274 = vpack.c.bf16 %v271, %v270
  %v275 = vpack.c.bf16 %v273, %v272
  %276 = vst [vmem:[#allocation1] ss:$2 sm:$0xff] %v28
  %s277 = scalar_lea.vmem [#allocation1], 16
  %278 = vst [vmem:[%s277] ss:$2 sm:$0xff] %v29
  %v279 = vld.sshfl [vmem:[#allocation1] sm:$0xff pattern:$0x75316420]
  %v280 = vld.sshfl [vmem:[#allocation1 + $0x8] sm:$0xff pattern:$0x75316420]
  %v281 = vld.sshfl [vmem:[#allocation1 + $0x10] sm:$0xff pattern:$0x75316420]
  %v282 = vld.sshfl [vmem:[#allocation1 + $0x18] sm:$0xff pattern:$0x75316420]
  %287 = vrot.lane.b32.xlu0 %v279, 127
  %v288 = vpop.permute.xlu0 %287
  %289 = vrot.lane.b32.xlu0 %v280, 127
  %v290 = vpop.permute.xlu0 %289
  %291 = vrot.lane.b32.xlu0 %v281, 127
  %v292 = vpop.permute.xlu0 %291
  %293 = vrot.lane.b32.xlu0 %v282, 127
  %v294 = vpop.permute.xlu0 %293
  %vm295 = vcmp.lt.s32.totalorder %v53, 127
  %v296 = vsel %vm295, %v292, %v294
  %v297 = vsel %vm295, %v290, %v292
  %v298 = vsel %vm295, %v288, %v290
  %v299 = vsel %vm295, %v294, %v288
  %v300 = vpack.c.bf16 %v297, %v298
  %v301 = vpack.c.bf16 %v299, %v296
  %v302 = vperm.slane %v128, 2
  %v303 = vperm.slane %v132, 2
  %v304 = vperm.slane %v136, 2
  %v305 = vperm.slane %v140, 2
  %v306 = vunpack.c.l.bf16 %v300
  %v307 = vunpack.c.h.bf16 %v300
  %v308 = vunpack.c.l.bf16 %v301
  %v309 = vunpack.c.h.bf16 %v301
  %v310 = vunpack.c.l.bf16 %v302
  %v311 = vunpack.c.l.bf16 %v303
  %v312 = vunpack.c.l.bf16 %v304
  %v313 = vunpack.c.l.bf16 %v305
  %v314 = vmul.f32 %v306, %v310
  %v315 = vmul.f32 %v307, %v311
  %v316 = vmul.f32 %v308, %v312
  %v317 = vmul.f32 %v309, %v313
  %v318 = vpack.c.bf16 %v315, %v314
  %v319 = vpack.c.bf16 %v317, %v316
  %320 = vst [vmem:[#allocation1] ss:$2 sm:$0xff] %v28
  %s321 = scalar_lea.vmem [#allocation1], 16
  %322 = vst [vmem:[%s321] ss:$2 sm:$0xff] %v29
  %v323 = vld.sshfl [vmem:[#allocation1] sm:$0xff pattern:$0x75316420]
  %v324 = vld.sshfl [vmem:[#allocation1 + $0x8] sm:$0xff pattern:$0x75316420]
  %v325 = vld.sshfl [vmem:[#allocation1 + $0x10] sm:$0xff pattern:$0x75316420]
  %v326 = vld.sshfl [vmem:[#allocation1 + $0x18] sm:$0xff pattern:$0x75316420]
  %331 = vrot.lane.b32.xlu0 %v323, 113
  %v332 = vpop.permute.xlu0 %331
  %333 = vrot.lane.b32.xlu0 %v324, 113
  %v334 = vpop.permute.xlu0 %333
  %335 = vrot.lane.b32.xlu0 %v325, 113
  %v336 = vpop.permute.xlu0 %335
  %337 = vrot.lane.b32.xlu0 %v326, 113
  %v338 = vpop.permute.xlu0 %337
  %vm339 = vcmp.lt.s32.totalorder %v53, 113
  %v340 = vsel %vm339, %v336, %v338
  %v341 = vsel %vm339, %v334, %v336
  %v342 = vsel %vm339, %v332, %v334
  %v343 = vsel %vm339, %v338, %v332
  %v344 = vpack.c.bf16 %v341, %v342
  %v345 = vpack.c.bf16 %v343, %v340
  %v346 = vperm.slane %v72, 3
  %v347 = vperm.slane %v76, 3
  %v348 = vperm.slane %v80, 3
  %v349 = vperm.slane %v84, 3
  %v350 = vunpack.c.l.bf16 %v344
  %v351 = vunpack.c.h.bf16 %v344
  %v352 = vunpack.c.l.bf16 %v345
  %v353 = vunpack.c.h.bf16 %v345
  %v354 = vunpack.c.l.bf16 %v346
  %v355 = vunpack.c.l.bf16 %v347
  %v356 = vunpack.c.l.bf16 %v348
  %v357 = vunpack.c.l.bf16 %v349
  %v358 = vmul.f32 %v350, %v354
  %v359 = vmul.f32 %v351, %v355
  %v360 = vmul.f32 %v352, %v356
  %v361 = vmul.f32 %v353, %v357
  %v362 = vpack.c.bf16 %v359, %v358
  %v363 = vpack.c.bf16 %v361, %v360
  %364 = vst [vmem:[#allocation1] ss:$2 sm:$0xff] %v28
  %s365 = scalar_lea.vmem [#allocation1], 16
  %366 = vst [vmem:[%s365] ss:$2 sm:$0xff] %v29
  %v367 = vld.sshfl [vmem:[#allocation1] sm:$0xff pattern:$0x75316420]
  %v368 = vld.sshfl [vmem:[#allocation1 + $0x8] sm:$0xff pattern:$0x75316420]
  %v369 = vld.sshfl [vmem:[#allocation1 + $0x10] sm:$0xff pattern:$0x75316420]
  %v370 = vld.sshfl [vmem:[#allocation1 + $0x18] sm:$0xff pattern:$0x75316420]
  %375 = vrot.lane.b32.xlu0 %v367, 112
  %v376 = vpop.permute.xlu0 %375
  %377 = vrot.lane.b32.xlu0 %v368, 112
  %v378 = vpop.permute.xlu0 %377
  %379 = vrot.lane.b32.xlu0 %v369, 112
  %v380 = vpop.permute.xlu0 %379
  %381 = vrot.lane.b32.xlu0 %v370, 112
  %v382 = vpop.permute.xlu0 %381
  %vm383 = vcmp.lt.s32.totalorder %v53, 112
  %v384 = vsel %vm383, %v380, %v382
  %v385 = vsel %vm383, %v378, %v380
  %v386 = vsel %vm383, %v376, %v378
  %v387 = vsel %vm383, %v382, %v376
  %v388 = vpack.c.bf16 %v385, %v386
  %v389 = vpack.c.bf16 %v387, %v384
  %v390 = vperm.slane %v128, 3
  %v391 = vperm.slane %v132, 3
  %v392 = vperm.slane %v136, 3
  %v393 = vperm.slane %v140, 3
  %v394 = vunpack.c.l.bf16 %v388
  %v395 = vunpack.c.h.bf16 %v388
  %v396 = vunpack.c.l.bf16 %v389
  %v397 = vunpack.c.h.bf16 %v389
  %v398 = vunpack.c.l.bf16 %v390
  %v399 = vunpack.c.l.bf16 %v391
  %v400 = vunpack.c.l.bf16 %v392
  %v401 = vunpack.c.l.bf16 %v393
  %v402 = vmul.f32 %v394, %v398
  %v403 = vmul.f32 %v395, %v399
  %v404 = vmul.f32 %v396, %v400
  %v405 = vmul.f32 %v397, %v401
  %v406 = vpack.c.bf16 %v403, %v402
  %v407 = vpack.c.bf16 %v405, %v404
  %408 = vst [vmem:[#allocation1] ss:$2 sm:$0xff] %v28
  %s409 = scalar_lea.vmem [#allocation1], 16
  %410 = vst [vmem:[%s409] ss:$2 sm:$0xff] %v29
  %v411 = vld.sshfl [vmem:[#allocation1] sm:$0xff pattern:$0x75316420]
  %v412 = vld.sshfl [vmem:[#allocation1 + $0x8] sm:$0xff pattern:$0x75316420]
  %v413 = vld.sshfl [vmem:[#allocation1 + $0x10] sm:$0xff pattern:$0x75316420]
  %v414 = vld.sshfl [vmem:[#allocation1 + $0x18] sm:$0xff pattern:$0x75316420]
  %419 = vrot.lane.b32.xlu0 %v411, 111
  %v420 = vpop.permute.xlu0 %419
  %421 = vrot.lane.b32.xlu0 %v412, 111
  %v422 = vpop.permute.xlu0 %421
  %423 = vrot.lane.b32.xlu0 %v413, 111
  %v424 = vpop.permute.xlu0 %423
  %425 = vrot.lane.b32.xlu0 %v414, 111
  %v426 = vpop.permute.xlu0 %425
  %vm427 = vcmp.lt.s32.totalorder %v53, 111
  %v428 = vsel %vm427, %v424, %v426
  %v429 = vsel %vm427, %v422, %v424
  %v430 = vsel %vm427, %v420, %v422
  %v431 = vsel %vm427, %v426, %v420
  %v432 = vpack.c.bf16 %v429, %v430
  %v433 = vpack.c.bf16 %v431, %v428
  %v436 = vunpack.c.l.b16 %v26
  %v437 = vunpack.c.h.b16 %v26
  %v438 = vunpack.c.l.b16 %v27
  %v439 = vunpack.c.h.b16 %v27
  %v440 = vpack.c.b16 %v436, %v436
  %v441 = vpack.c.b16 %v437, %v437
  %v442 = vpack.c.b16 %v438, %v438
  %v443 = vpack.c.b16 %v439, %v439
  %v445 = vpack.i.b16 %v440, %v440
  %v447 = vperm.slane %v445, 0
  %v449 = vpack.i.b16 %v441, %v441
  %v451 = vperm.slane %v449, 0
  %v453 = vpack.i.b16 %v442, %v442
  %v455 = vperm.slane %v453, 0
  %v457 = vpack.i.b16 %v443, %v443
  %v459 = vperm.slane %v457, 0
  %v460 = vunpack.c.l.bf16 %v432
  %v461 = vunpack.c.h.bf16 %v432
  %v462 = vunpack.c.l.bf16 %v433
  %v463 = vunpack.c.h.bf16 %v433
  %v464 = vunpack.c.l.bf16 %v447
  %v465 = vunpack.c.l.bf16 %v451
  %v466 = vunpack.c.l.bf16 %v455
  %v467 = vunpack.c.l.bf16 %v459
  %v468 = vmul.f32 %v460, %v464
  %v469 = vmul.f32 %v461, %v465
  %v470 = vmul.f32 %v462, %v466
  %v471 = vmul.f32 %v463, %v467
  %v472 = vpack.c.bf16 %v469, %v468
  %v473 = vpack.c.bf16 %v471, %v470
  %v476 = vunpack.c.l.b16 %v99
  %v477 = vunpack.c.h.b16 %v99
  %v478 = vunpack.c.l.b16 %v100
  %v479 = vunpack.c.h.b16 %v100
  %v480 = vpack.c.b16 %v476, %v476
  %v481 = vpack.c.b16 %v477, %v477
  %v482 = vpack.c.b16 %v478, %v478
  %v483 = vpack.c.b16 %v479, %v479
  %v486 = vunpack.c.l.b16 %v155
  %v487 = vunpack.c.h.b16 %v155
  %v488 = vunpack.c.l.b16 %v156
  %v489 = vunpack.c.h.b16 %v156
  %v490 = vpack.c.b16 %v486, %v486
  %v491 = vpack.c.b16 %v487, %v487
  %v492 = vpack.c.b16 %v488, %v488
  %v493 = vpack.c.b16 %v489, %v489
  %v494 = vrot.slane %v490, 6
  %v495 = vrot.slane %v491, 6
  %v496 = vrot.slane %v492, 6
  %v497 = vrot.slane %v493, 6
  %v500 = vunpack.c.l.b16 %v199
  %v501 = vunpack.c.h.b16 %v199
  %v502 = vunpack.c.l.b16 %v200
  %v503 = vunpack.c.h.b16 %v200
  %v504 = vpack.c.b16 %v500, %v500
  %v505 = vpack.c.b16 %v501, %v501
  %v506 = vpack.c.b16 %v502, %v502
  %v507 = vpack.c.b16 %v503, %v503
  %v510 = vunpack.c.l.b16 %v243
  %v511 = vunpack.c.h.b16 %v243
  %v512 = vunpack.c.l.b16 %v244
  %v513 = vunpack.c.h.b16 %v244
  %v514 = vpack.c.b16 %v510, %v510
  %v515 = vpack.c.b16 %v511, %v511
  %v516 = vpack.c.b16 %v512, %v512
  %v517 = vpack.c.b16 %v513, %v513
  %v518 = vrot.slane %v514, 2
  %v519 = vrot.slane %v515, 2
  %v520 = vrot.slane %v516, 2
  %v521 = vrot.slane %v517, 2
  %v524 = vunpack.c.l.b16 %v274
  %v525 = vunpack.c.h.b16 %v274
  %v526 = vunpack.c.l.b16 %v275
  %v527 = vunpack.c.h.b16 %v275
  %v528 = vpack.c.b16 %v524, %v524
  %v529 = vpack.c.b16 %v525, %v525
  %v530 = vpack.c.b16 %v526, %v526
  %v531 = vpack.c.b16 %v527, %v527
  %v534 = vunpack.c.l.b16 %v318
  %v535 = vunpack.c.h.b16 %v318
  %v536 = vunpack.c.l.b16 %v319
  %v537 = vunpack.c.h.b16 %v319
  %v538 = vpack.c.b16 %v534, %v534
  %v539 = vpack.c.b16 %v535, %v535
  %v540 = vpack.c.b16 %v536, %v536
  %v541 = vpack.c.b16 %v537, %v537
  %v542 = vrot.slane %v538, 6
  %v543 = vrot.slane %v539, 6
  %v544 = vrot.slane %v540, 6
  %v545 = vrot.slane %v541, 6
  %v548 = vunpack.c.l.b16 %v362
  %v549 = vunpack.c.h.b16 %v362
  %v550 = vunpack.c.l.b16 %v363
  %v551 = vunpack.c.h.b16 %v363
  %v552 = vpack.c.b16 %v548, %v548
  %v553 = vpack.c.b16 %v549, %v549
  %v554 = vpack.c.b16 %v550, %v550
  %v555 = vpack.c.b16 %v551, %v551
  %v558 = vunpack.c.l.b16 %v406
  %v559 = vunpack.c.h.b16 %v406
  %v560 = vunpack.c.l.b16 %v407
  %v561 = vunpack.c.h.b16 %v407
  %v562 = vpack.c.b16 %v558, %v558
  %v563 = vpack.c.b16 %v559, %v559
  %v564 = vpack.c.b16 %v560, %v560
  %v565 = vpack.c.b16 %v561, %v561
  %v566 = vrot.slane %v562, 2
  %v567 = vrot.slane %v563, 2
  %v568 = vrot.slane %v564, 2
  %v569 = vrot.slane %v565, 2
  %v572 = vunpack.c.l.b16 %v472
  %v573 = vunpack.c.h.b16 %v472
  %v574 = vunpack.c.l.b16 %v473
  %v575 = vunpack.c.h.b16 %v473
  %v576 = vpack.c.b16 %v572, %v572
  %v577 = vpack.c.b16 %v573, %v573
  %v578 = vpack.c.b16 %v574, %v574
  %v579 = vpack.c.b16 %v575, %v575
  %vm580 = vcmask 1041408
  %v583 = vsel %vm580, %v480, %v494
  %v586 = vsel %vm580, %v481, %v495
  %v589 = vsel %vm580, %v482, %v496
  %v592 = vsel %vm580, %v483, %v497
  %vm593 = vcmask 1043456
  %v595 = vsel %vm593, %v583, %v504
  %v597 = vsel %vm593, %v586, %v505
  %v599 = vsel %vm593, %v589, %v506
  %v601 = vsel %vm593, %v592, %v507
  %vm602 = vcmask 1045504
  %v604 = vsel %vm602, %v595, %v518
  %v607 = vsel %vm602, %v597, %v519
  %v610 = vsel %vm602, %v599, %v520
  %v613 = vsel %vm602, %v601, %v521
  %v617 = vsel %vm580, %v528, %v542
  %v620 = vsel %vm580, %v529, %v543
  %v623 = vsel %vm580, %v530, %v544
  %v626 = vsel %vm580, %v531, %v545
  %v628 = vsel %vm593, %v617, %v552
  %v630 = vsel %vm593, %v620, %v553
  %v632 = vsel %vm593, %v623, %v554
  %v634 = vsel %vm593, %v626, %v555
  %v636 = vsel %vm602, %v628, %v566
  %v639 = vsel %vm602, %v630, %v567
  %v642 = vsel %vm602, %v632, %v568
  %v645 = vsel %vm602, %v634, %v569
  %vm647 = vcmask 293888
  %v649 = vsel %vm647, %v30, 0
  %v652 = vsel %vm580, %v576, 0
  %v655 = vsel %vm580, %v577, 0
  %v658 = vsel %vm580, %v578, 0
  %v661 = vsel %vm580, %v579, 0
  %663 = vmatpush.bf16.msra.mxu0 0
  %664 = vmatpush.bf16.msra.mxu0 0
  %665 = vmatpush.bf16.msra.mxu0 0
  %666 = vmatpush.bf16.msra.mxu0 0
  %667 = vmatpush.bf16.msra.mxu0 0
  %668 = vmatpush.bf16.msra.mxu0 %v652
  %669 = vmatpush.bf16.msra.mxu0 %v636
  %670 = vmatpush.bf16.msra.mxu0 %v604
  %671 = vmatmul.bf16.gmra.mxu0 %v649
  %v672 = vpop.f32.mrf.mxu0
  %v673 = vadd.f32 0.0, %v672
  %v674 = vpop.f32.mrf.mxu0
  %675 = vdwg.mxu0
  %676 = vmatpush.bf16.msra.mxu0 0
  %677 = vmatpush.bf16.msra.mxu0 0
  %678 = vmatpush.bf16.msra.mxu0 0
  %679 = vmatpush.bf16.msra.mxu0 0
  %680 = vmatpush.bf16.msra.mxu0 0
  %681 = vmatpush.bf16.msra.mxu0 %v655
  %682 = vmatpush.bf16.msra.mxu0 %v639
  %683 = vmatpush.bf16.msra.mxu0 %v607
  %684 = vmatmul.bf16.gmra.mxu0 %v649
  %v685 = vpop.f32.mrf.mxu0
  %v686 = vadd.f32 0.0, %v685
  %v687 = vpop.f32.mrf.mxu0
  %688 = vdwg.mxu0
  %689 = vmatpush.bf16.msra.mxu0 0
  %690 = vmatpush.bf16.msra.mxu0 0
  %691 = vmatpush.bf16.msra.mxu0 0
  %692 = vmatpush.bf16.msra.mxu0 0
  %693 = vmatpush.bf16.msra.mxu0 0
  %694 = vmatpush.bf16.msra.mxu0 %v658
  %695 = vmatpush.bf16.msra.mxu0 %v642
  %696 = vmatpush.bf16.msra.mxu0 %v610
  %697 = vmatmul.bf16.gmra.mxu0 %v649
  %v698 = vpop.f32.mrf.mxu0
  %v699 = vadd.f32 0.0, %v698
  %v700 = vpop.f32.mrf.mxu0
  %701 = vdwg.mxu0
  %702 = vmatpush.bf16.msra.mxu0 0
  %703 = vmatpush.bf16.msra.mxu0 0
  %704 = vmatpush.bf16.msra.mxu0 0
  %705 = vmatpush.bf16.msra.mxu0 0
  %706 = vmatpush.bf16.msra.mxu0 0
  %707 = vmatpush.bf16.msra.mxu0 %v661
  %708 = vmatpush.bf16.msra.mxu0 %v645
  %709 = vmatpush.bf16.msra.mxu0 %v613
  %710 = vmatmul.bf16.gmra.mxu0 %v649
  %v711 = vpop.f32.mrf.mxu0
  %v712 = vadd.f32 0.0, %v711
  %v713 = vpop.f32.mrf.mxu0
  %714 = vdwg.mxu0
  %v715 = vsel %vm593, %v673, 0.0
  %v716 = vsel %vm593, %v686, 0.0
  %v717 = vadd.f32 %v715, %v716
  %718 = vadd.xlane.f32.xlu0 %v717
  %v719 = vpop.xlane.xlu0 %718
  %v720 = vrcp.pop 256.0
  %v721 = vmul.f32 256.0, %v720
  %v722 = vsub.f32 1.0, %v721
  %v723 = vmul.f32 %v720, %v722
  %v724 = vadd.f32 %v720, %v723
  %vm725 = vweird.f32 %v720
  %v726 = vsel %vm725, %v720, %v724
  %v727 = vmul.f32 %v719, %v726
  %v728 = vsub.f32 %v673, %v727
  %v729 = vsub.f32 %v686, %v727
  %v730 = vmul.f32 %v728, %v728
  %v731 = vmul.f32 %v729, %v729
  %v732 = vsel %vm593, %v730, 0.0
  %v733 = vsel %vm593, %v731, 0.0
  %v734 = vadd.f32 %v732, %v733
  %735 = vadd.xlane.f32.xlu0 %v734
  %v736 = vpop.xlane.xlu0 %735
  %v737 = vmul.f32 %v736, %v726
  %v738 = vadd.f32 %v737, 1e-05
  %v739 = vrsqrt.pop %v738
  %v740 = vmul.f32 %v739, %v738
  %v741 = vmul.f32 %v740, %v739
  %v742 = vmul.f32 0.5, %v741
  %v743 = vsub.f32 1.5, %v742
  %v744 = vmul.f32 %v739, %v743
  %vm745 = vweird.f32 %v738
  %vm746 = vweird.f32 %v739
  %vm747 = vmor %vm745, %vm746
  %v748 = vsel %vm747, %v739, %v744
  %v749 = vmul.f32 %v728, %v748
  %v750 = vmul.f32 %v729, %v748
  %v751 = vmax.f32 %v749, 0.0
  %v752 = vmax.f32 %v750, 0.0
  %v753 = vsel %vm593, %v699, 0.0
  %v754 = vsel %vm593, %v712, 0.0
  %v755 = vadd.f32 %v753, %v754
  %756 = vadd.xlane.f32.xlu0 %v755
  %v757 = vpop.xlane.xlu0 %756
  %v758 = vmul.f32 %v757, %v726
  %v759 = vsub.f32 %v699, %v758
  %v760 = vsub.f32 %v712, %v758
  %v761 = vmul.f32 %v759, %v759
  %v762 = vmul.f32 %v760, %v760
  %v763 = vsel %vm593, %v761, 0.0
  %v764 = vsel %vm593, %v762, 0.0
  %v765 = vadd.f32 %v763, %v764
  %766 = vadd.xlane.f32.xlu0 %v765
  %v767 = vpop.xlane.xlu0 %766
  %v768 = vmul.f32 %v767, %v726
  %v769 = vadd.f32 %v768, 1e-05
  %v770 = vrsqrt.pop %v769
  %v771 = vmul.f32 %v770, %v769
  %v772 = vmul.f32 %v771, %v770
  %v773 = vmul.f32 0.5, %v772
  %v774 = vsub.f32 1.5, %v773
  %v775 = vmul.f32 %v770, %v774
  %vm776 = vweird.f32 %v769
  %vm777 = vweird.f32 %v770
  %vm778 = vmor %vm776, %vm777
  %v779 = vsel %vm778, %v770, %v775
  %v780 = vmul.f32 %v759, %v779
  %v781 = vmul.f32 %v760, %v779
  %v782 = vmax.f32 %v780, 0.0
  %v783 = vmax.f32 %v781, 0.0
  %v784 = vld [vmem:[%s3] sm:$0x3]
  %785 = vrot.lane.b32.xlu0 %v751, 17
  %v786 = vpop.permute.xlu0 %785
  %787 = vrot.lane.b32.xlu0 %v752, 17
  %v788 = vpop.permute.xlu0 %787
  %789 = vrot.lane.b32.xlu0 %v782, 17
  %v790 = vpop.permute.xlu0 %789
  %791 = vrot.lane.b32.xlu0 %v783, 17
  %v792 = vpop.permute.xlu0 %791
  %v793 = vsel %vm54, %v790, %v792
  %v794 = vsel %vm54, %v788, %v790
  %v795 = vsel %vm54, %v786, %v788
  %v796 = vsel %vm54, %v792, %v786
  %v797 = vpack.c.bf16 %v795, %v796
  %v798 = vpack.c.bf16 %v793, %v794
  %v799 = vunpack.c.l.bf16 %v797
  %v800 = vunpack.c.h.bf16 %v797
  %v801 = vunpack.c.l.bf16 %v798
  %v802 = vunpack.c.h.bf16 %v798
  %v803 = vmul.f32 %v799, %v91
  %v804 = vmul.f32 %v800, %v92
  %v805 = vmul.f32 %v801, %v93
  %v806 = vmul.f32 %v802, %v94
  %v807 = vpack.c.bf16 %v804, %v803
  %v808 = vpack.c.bf16 %v806, %v805
  %809 = vrot.lane.b32.xlu0 %v751, 16
  %v810 = vpop.permute.xlu0 %809
  %811 = vrot.lane.b32.xlu0 %v752, 16
  %v812 = vpop.permute.xlu0 %811
  %813 = vrot.lane.b32.xlu0 %v782, 16
  %v814 = vpop.permute.xlu0 %813
  %815 = vrot.lane.b32.xlu0 %v783, 16
  %v816 = vpop.permute.xlu0 %815
  %v817 = vsel %vm120, %v814, %v816
  %v818 = vsel %vm120, %v812, %v814
  %v819 = vsel %vm120, %v810, %v812
  %v820 = vsel %vm120, %v816, %v810
  %v821 = vpack.c.bf16 %v819, %v820
  %v822 = vpack.c.bf16 %v817, %v818
  %v823 = vunpack.c.l.bf16 %v821
  %v824 = vunpack.c.h.bf16 %v821
  %v825 = vunpack.c.l.bf16 %v822
  %v826 = vunpack.c.h.bf16 %v822
  %v827 = vmul.f32 %v823, %v147
  %v828 = vmul.f32 %v824, %v148
  %v829 = vmul.f32 %v825, %v149
  %v830 = vmul.f32 %v826, %v150
  %v831 = vpack.c.bf16 %v828, %v827
  %v832 = vpack.c.bf16 %v830, %v829
  %833 = vrot.lane.b32.xlu0 %v751, 15
  %v834 = vpop.permute.xlu0 %833
  %835 = vrot.lane.b32.xlu0 %v752, 15
  %v836 = vpop.permute.xlu0 %835
  %837 = vrot.lane.b32.xlu0 %v782, 15
  %v838 = vpop.permute.xlu0 %837
  %839 = vrot.lane.b32.xlu0 %v783, 15
  %v840 = vpop.permute.xlu0 %839
  %v841 = vsel %vm176, %v838, %v840
  %v842 = vsel %vm176, %v836, %v838
  %v843 = vsel %vm176, %v834, %v836
  %v844 = vsel %vm176, %v840, %v834
  %v845 = vpack.c.bf16 %v843, %v844
  %v846 = vpack.c.bf16 %v841, %v842
  %v847 = vunpack.c.l.bf16 %v845
  %v848 = vunpack.c.h.bf16 %v845
  %v849 = vunpack.c.l.bf16 %v846
  %v850 = vunpack.c.h.bf16 %v846
  %v851 = vmul.f32 %v847, %v191
  %v852 = vmul.f32 %v848, %v192
  %v853 = vmul.f32 %v849, %v193
  %v854 = vmul.f32 %v850, %v194
  %v855 = vpack.c.bf16 %v852, %v851
  %v856 = vpack.c.bf16 %v854, %v853
  %857 = vrot.lane.b32.xlu0 %v751, 1
  %v858 = vpop.permute.xlu0 %857
  %859 = vrot.lane.b32.xlu0 %v752, 1
  %v860 = vpop.permute.xlu0 %859
  %861 = vrot.lane.b32.xlu0 %v782, 1
  %v862 = vpop.permute.xlu0 %861
  %863 = vrot.lane.b32.xlu0 %v783, 1
  %v864 = vpop.permute.xlu0 %863
  %v865 = vsel %vm220, %v862, %v864
  %v866 = vsel %vm220, %v860, %v862
  %v867 = vsel %vm220, %v858, %v860
  %v868 = vsel %vm220, %v864, %v858
  %v869 = vpack.c.bf16 %v867, %v868
  %v870 = vpack.c.bf16 %v865, %v866
  %v871 = vunpack.c.l.bf16 %v869
  %v872 = vunpack.c.h.bf16 %v869
  %v873 = vunpack.c.l.bf16 %v870
  %v874 = vunpack.c.h.bf16 %v870
  %v875 = vmul.f32 %v871, %v235
  %v876 = vmul.f32 %v872, %v236
  %v877 = vmul.f32 %v873, %v237
  %v878 = vmul.f32 %v874, %v238
  %v879 = vpack.c.bf16 %v876, %v875
  %v880 = vpack.c.bf16 %v878, %v877
  %v881 = vpack.c.bf16 %v752, %v751
  %v882 = vpack.c.bf16 %v783, %v782
  %v883 = vunpack.c.l.bf16 %v881
  %v884 = vunpack.c.h.bf16 %v881
  %v885 = vunpack.c.l.bf16 %v882
  %v886 = vunpack.c.h.bf16 %v882
  %v887 = vmul.f32 %v883, %v266
  %v888 = vmul.f32 %v884, %v267
  %v889 = vmul.f32 %v885, %v268
  %v890 = vmul.f32 %v886, %v269
  %v891 = vpack.c.bf16 %v888, %v887
  %v892 = vpack.c.bf16 %v890, %v889
  %893 = vrot.lane.b32.xlu0 %v751, 127
  %v894 = vpop.permute.xlu0 %893
  %895 = vrot.lane.b32.xlu0 %v752, 127
  %v896 = vpop.permute.xlu0 %895
  %897 = vrot.lane.b32.xlu0 %v782, 127
  %v898 = vpop.permute.xlu0 %897
  %899 = vrot.lane.b32.xlu0 %v783, 127
  %v900 = vpop.permute.xlu0 %899
  %v901 = vsel %vm295, %v898, %v900
  %v902 = vsel %vm295, %v896, %v898
  %v903 = vsel %vm295, %v894, %v896
  %v904 = vsel %vm295, %v900, %v894
  %v905 = vpack.c.bf16 %v902, %v903
  %v906 = vpack.c.bf16 %v904, %v901
  %v907 = vunpack.c.l.bf16 %v905
  %v908 = vunpack.c.h.bf16 %v905
  %v909 = vunpack.c.l.bf16 %v906
  %v910 = vunpack.c.h.bf16 %v906
  %v911 = vmul.f32 %v907, %v310
  %v912 = vmul.f32 %v908, %v311
  %v913 = vmul.f32 %v909, %v312
  %v914 = vmul.f32 %v910, %v313
  %v915 = vpack.c.bf16 %v912, %v911
  %v916 = vpack.c.bf16 %v914, %v913
  %917 = vrot.lane.b32.xlu0 %v751, 113
  %v918 = vpop.permute.xlu0 %917
  %919 = vrot.lane.b32.xlu0 %v752, 113
  %v920 = vpop.permute.xlu0 %919
  %921 = vrot.lane.b32.xlu0 %v782, 113
  %v922 = vpop.permute.xlu0 %921
  %923 = vrot.lane.b32.xlu0 %v783, 113
  %v924 = vpop.permute.xlu0 %923
  %v925 = vsel %vm339, %v922, %v924
  %v926 = vsel %vm339, %v920, %v922
  %v927 = vsel %vm339, %v918, %v920
  %v928 = vsel %vm339, %v924, %v918
  %v929 = vpack.c.bf16 %v926, %v927
  %v930 = vpack.c.bf16 %v928, %v925
  %v931 = vunpack.c.l.bf16 %v929
  %v932 = vunpack.c.h.bf16 %v929
  %v933 = vunpack.c.l.bf16 %v930
  %v934 = vunpack.c.h.bf16 %v930
  %v935 = vmul.f32 %v931, %v354
  %v936 = vmul.f32 %v932, %v355
  %v937 = vmul.f32 %v933, %v356
  %v938 = vmul.f32 %v934, %v357
  %v939 = vpack.c.bf16 %v936, %v935
  %v940 = vpack.c.bf16 %v938, %v937
  %941 = vrot.lane.b32.xlu0 %v751, 112
  %v942 = vpop.permute.xlu0 %941
  %943 = vrot.lane.b32.xlu0 %v752, 112
  %v944 = vpop.permute.xlu0 %943
  %945 = vrot.lane.b32.xlu0 %v782, 112
  %v946 = vpop.permute.xlu0 %945
  %947 = vrot.lane.b32.xlu0 %v783, 112
  %v948 = vpop.permute.xlu0 %947
  %v949 = vsel %vm383, %v946, %v948
  %v950 = vsel %vm383, %v944, %v946
  %v951 = vsel %vm383, %v942, %v944
  %v952 = vsel %vm383, %v948, %v942
  %v953 = vpack.c.bf16 %v950, %v951
  %v954 = vpack.c.bf16 %v952, %v949
  %v955 = vunpack.c.l.bf16 %v953
  %v956 = vunpack.c.h.bf16 %v953
  %v957 = vunpack.c.l.bf16 %v954
  %v958 = vunpack.c.h.bf16 %v954
  %v959 = vmul.f32 %v955, %v398
  %v960 = vmul.f32 %v956, %v399
  %v961 = vmul.f32 %v957, %v400
  %v962 = vmul.f32 %v958, %v401
  %v963 = vpack.c.bf16 %v960, %v959
  %v964 = vpack.c.bf16 %v962, %v961
  %965 = vrot.lane.b32.xlu0 %v751, 111
  %v966 = vpop.permute.xlu0 %965
  %967 = vrot.lane.b32.xlu0 %v752, 111
  %v968 = vpop.permute.xlu0 %967
  %969 = vrot.lane.b32.xlu0 %v782, 111
  %v970 = vpop.permute.xlu0 %969
  %971 = vrot.lane.b32.xlu0 %v783, 111
  %v972 = vpop.permute.xlu0 %971
  %v973 = vsel %vm427, %v970, %v972
  %v974 = vsel %vm427, %v968, %v970
  %v975 = vsel %vm427, %v966, %v968
  %v976 = vsel %vm427, %v972, %v966
  %v977 = vpack.c.bf16 %v974, %v975
  %v978 = vpack.c.bf16 %v976, %v973
  %v979 = vunpack.c.l.bf16 %v977
  %v980 = vunpack.c.h.bf16 %v977
  %v981 = vunpack.c.l.bf16 %v978
  %v982 = vunpack.c.h.bf16 %v978
  %v983 = vmul.f32 %v979, %v464
  %v984 = vmul.f32 %v980, %v465
  %v985 = vmul.f32 %v981, %v466
  %v986 = vmul.f32 %v982, %v467
  %v987 = vpack.c.bf16 %v984, %v983
  %v988 = vpack.c.bf16 %v986, %v985
  %v991 = vunpack.c.l.b16 %v807
  %v992 = vunpack.c.h.b16 %v807
  %v993 = vunpack.c.l.b16 %v808
  %v994 = vunpack.c.h.b16 %v808
  %v995 = vpack.c.b16 %v991, %v991
  %v996 = vpack.c.b16 %v992, %v992
  %v997 = vpack.c.b16 %v993, %v993
  %v998 = vpack.c.b16 %v994, %v994
  %v1001 = vunpack.c.l.b16 %v831
  %v1002 = vunpack.c.h.b16 %v831
  %v1003 = vunpack.c.l.b16 %v832
  %v1004 = vunpack.c.h.b16 %v832
  %v1005 = vpack.c.b16 %v1001, %v1001
  %v1006 = vpack.c.b16 %v1002, %v1002
  %v1007 = vpack.c.b16 %v1003, %v1003
  %v1008 = vpack.c.b16 %v1004, %v1004
  %v1009 = vrot.slane %v1005, 6
  %v1010 = vrot.slane %v1006, 6
  %v1011 = vrot.slane %v1007, 6
  %v1012 = vrot.slane %v1008, 6
  %v1015 = vunpack.c.l.b16 %v855
  %v1016 = vunpack.c.h.b16 %v855
  %v1017 = vunpack.c.l.b16 %v856
  %v1018 = vunpack.c.h.b16 %v856
  %v1019 = vpack.c.b16 %v1015, %v1015
  %v1020 = vpack.c.b16 %v1016, %v1016
  %v1021 = vpack.c.b16 %v1017, %v1017
  %v1022 = vpack.c.b16 %v1018, %v1018
  %v1025 = vunpack.c.l.b16 %v879
  %v1026 = vunpack.c.h.b16 %v879
  %v1027 = vunpack.c.l.b16 %v880
  %v1028 = vunpack.c.h.b16 %v880
  %v1029 = vpack.c.b16 %v1025, %v1025
  %v1030 = vpack.c.b16 %v1026, %v1026
  %v1031 = vpack.c.b16 %v1027, %v1027
  %v1032 = vpack.c.b16 %v1028, %v1028
  %v1033 = vrot.slane %v1029, 2
  %v1034 = vrot.slane %v1030, 2
  %v1035 = vrot.slane %v1031, 2
  %v1036 = vrot.slane %v1032, 2
  %v1039 = vunpack.c.l.b16 %v891
  %v1040 = vunpack.c.h.b16 %v891
  %v1041 = vunpack.c.l.b16 %v892
  %v1042 = vunpack.c.h.b16 %v892
  %v1043 = vpack.c.b16 %v1039, %v1039
  %v1044 = vpack.c.b16 %v1040, %v1040
  %v1045 = vpack.c.b16 %v1041, %v1041
  %v1046 = vpack.c.b16 %v1042, %v1042
  %v1049 = vunpack.c.l.b16 %v915
  %v1050 = vunpack.c.h.b16 %v915
  %v1051 = vunpack.c.l.b16 %v916
  %v1052 = vunpack.c.h.b16 %v916
  %v1053 = vpack.c.b16 %v1049, %v1049
  %v1054 = vpack.c.b16 %v1050, %v1050
  %v1055 = vpack.c.b16 %v1051, %v1051
  %v1056 = vpack.c.b16 %v1052, %v1052
  %v1057 = vrot.slane %v1053, 6
  %v1058 = vrot.slane %v1054, 6
  %v1059 = vrot.slane %v1055, 6
  %v1060 = vrot.slane %v1056, 6
  %v1063 = vunpack.c.l.b16 %v939
  %v1064 = vunpack.c.h.b16 %v939
  %v1065 = vunpack.c.l.b16 %v940
  %v1066 = vunpack.c.h.b16 %v940
  %v1067 = vpack.c.b16 %v1063, %v1063
  %v1068 = vpack.c.b16 %v1064, %v1064
  %v1069 = vpack.c.b16 %v1065, %v1065
  %v1070 = vpack.c.b16 %v1066, %v1066
  %v1073 = vunpack.c.l.b16 %v963
  %v1074 = vunpack.c.h.b16 %v963
  %v1075 = vunpack.c.l.b16 %v964
  %v1076 = vunpack.c.h.b16 %v964
  %v1077 = vpack.c.b16 %v1073, %v1073
  %v1078 = vpack.c.b16 %v1074, %v1074
  %v1079 = vpack.c.b16 %v1075, %v1075
  %v1080 = vpack.c.b16 %v1076, %v1076
  %v1081 = vrot.slane %v1077, 2
  %v1082 = vrot.slane %v1078, 2
  %v1083 = vrot.slane %v1079, 2
  %v1084 = vrot.slane %v1080, 2
  %v1087 = vunpack.c.l.b16 %v987
  %v1088 = vunpack.c.h.b16 %v987
  %v1089 = vunpack.c.l.b16 %v988
  %v1090 = vunpack.c.h.b16 %v988
  %v1091 = vpack.c.b16 %v1087, %v1087
  %v1092 = vpack.c.b16 %v1088, %v1088
  %v1093 = vpack.c.b16 %v1089, %v1089
  %v1094 = vpack.c.b16 %v1090, %v1090
  %v1097 = vsel %vm580, %v995, %v1009
  %v1100 = vsel %vm580, %v996, %v1010
  %v1103 = vsel %vm580, %v997, %v1011
  %v1106 = vsel %vm580, %v998, %v1012
  %v1108 = vsel %vm593, %v1097, %v1019
  %v1110 = vsel %vm593, %v1100, %v1020
  %v1112 = vsel %vm593, %v1103, %v1021
  %v1114 = vsel %vm593, %v1106, %v1022
  %v1116 = vsel %vm602, %v1108, %v1033
  %v1119 = vsel %vm602, %v1110, %v1034
  %v1122 = vsel %vm602, %v1112, %v1035
  %v1125 = vsel %vm602, %v1114, %v1036
  %v1129 = vsel %vm580, %v1043, %v1057
  %v1132 = vsel %vm580, %v1044, %v1058
  %v1135 = vsel %vm580, %v1045, %v1059
  %v1138 = vsel %vm580, %v1046, %v1060
  %v1140 = vsel %vm593, %v1129, %v1067
  %v1142 = vsel %vm593, %v1132, %v1068
  %v1144 = vsel %vm593, %v1135, %v1069
  %v1146 = vsel %vm593, %v1138, %v1070
  %v1148 = vsel %vm602, %v1140, %v1081
  %v1151 = vsel %vm602, %v1142, %v1082
  %v1154 = vsel %vm602, %v1144, %v1083
  %v1157 = vsel %vm602, %v1146, %v1084
  %v1160 = vsel %vm647, %v784, 0
  %v1163 = vsel %vm580, %v1091, 0
  %v1166 = vsel %vm580, %v1092, 0
  %v1169 = vsel %vm580, %v1093, 0
  %v1172 = vsel %vm580, %v1094, 0
  %1174 = vmatpush.bf16.msra.mxu0 0
  %1175 = vmatpush.bf16.msra.mxu0 0
  %1176 = vmatpush.bf16.msra.mxu0 0
  %1177 = vmatpush.bf16.msra.mxu0 0
  %1178 = vmatpush.bf16.msra.mxu0 0
  %1179 = vmatpush.bf16.msra.mxu0 %v1163
  %1180 = vmatpush.bf16.msra.mxu0 %v1148
  %1181 = vmatpush.bf16.msra.mxu0 %v1116
  %1182 = vmatmul.bf16.gmra.mxu0 %v1160
  %v1183 = vpop.f32.mrf.mxu0
  %v1184 = vadd.f32 0.0, %v1183
  %v1185 = vpop.f32.mrf.mxu0
  %1186 = vdwg.mxu0
  %1187 = vmatpush.bf16.msra.mxu0 0
  %1188 = vmatpush.bf16.msra.mxu0 0
  %1189 = vmatpush.bf16.msra.mxu0 0
  %1190 = vmatpush.bf16.msra.mxu0 0
  %1191 = vmatpush.bf16.msra.mxu0 0
  %1192 = vmatpush.bf16.msra.mxu0 %v1166
  %1193 = vmatpush.bf16.msra.mxu0 %v1151
  %1194 = vmatpush.bf16.msra.mxu0 %v1119
  %1195 = vmatmul.bf16.gmra.mxu0 %v1160
  %v1196 = vpop.f32.mrf.mxu0
  %v1197 = vadd.f32 0.0, %v1196
  %v1198 = vpop.f32.mrf.mxu0
  %1199 = vdwg.mxu0
  %1200 = vmatpush.bf16.msra.mxu0 0
  %1201 = vmatpush.bf16.msra.mxu0 0
  %1202 = vmatpush.bf16.msra.mxu0 0
  %1203 = vmatpush.bf16.msra.mxu0 0
  %1204 = vmatpush.bf16.msra.mxu0 0
  %1205 = vmatpush.bf16.msra.mxu0 %v1169
  %1206 = vmatpush.bf16.msra.mxu0 %v1154
  %1207 = vmatpush.bf16.msra.mxu0 %v1122
  %1208 = vmatmul.bf16.gmra.mxu0 %v1160
  %v1209 = vpop.f32.mrf.mxu0
  %v1210 = vadd.f32 0.0, %v1209
  %v1211 = vpop.f32.mrf.mxu0
  %1212 = vdwg.mxu0
  %1213 = vmatpush.bf16.msra.mxu0 0
  %1214 = vmatpush.bf16.msra.mxu0 0
  %1215 = vmatpush.bf16.msra.mxu0 0
  %1216 = vmatpush.bf16.msra.mxu0 0
  %1217 = vmatpush.bf16.msra.mxu0 0
  %1218 = vmatpush.bf16.msra.mxu0 %v1172
  %1219 = vmatpush.bf16.msra.mxu0 %v1157
  %1220 = vmatpush.bf16.msra.mxu0 %v1125
  %1221 = vmatmul.bf16.gmra.mxu0 %v1160
  %v1222 = vpop.f32.mrf.mxu0
  %v1223 = vadd.f32 0.0, %v1222
  %v1224 = vpop.f32.mrf.mxu0
  %1225 = vdwg.mxu0
  %v1226 = vsel %vm593, %v1184, 0.0
  %v1227 = vsel %vm593, %v1197, 0.0
  %v1228 = vadd.f32 %v1226, %v1227
  %1229 = vadd.xlane.f32.xlu0 %v1228
  %v1230 = vpop.xlane.xlu0 %1229
  %v1231 = vmul.f32 %v1230, %v726
  %v1232 = vsub.f32 %v1184, %v1231
  %v1233 = vsub.f32 %v1197, %v1231
  %v1234 = vmul.f32 %v1232, %v1232
  %v1235 = vmul.f32 %v1233, %v1233
  %v1236 = vsel %vm593, %v1234, 0.0
  %v1237 = vsel %vm593, %v1235, 0.0
  %v1238 = vadd.f32 %v1236, %v1237
  %1239 = vadd.xlane.f32.xlu0 %v1238
  %v1240 = vpop.xlane.xlu0 %1239
  %v1241 = vmul.f32 %v1240, %v726
  %v1242 = vadd.f32 %v1241, 1e-05
  %v1243 = vrsqrt.pop %v1242
  %v1244 = vmul.f32 %v1243, %v1242
  %v1245 = vmul.f32 %v1244, %v1243
  %v1246 = vmul.f32 0.5, %v1245
  %v1247 = vsub.f32 1.5, %v1246
  %v1248 = vmul.f32 %v1243, %v1247
  %vm1249 = vweird.f32 %v1242
  %vm1250 = vweird.f32 %v1243
  %vm1251 = vmor %vm1249, %vm1250
  %v1252 = vsel %vm1251, %v1243, %v1248
  %v1253 = vmul.f32 %v1232, %v1252
  %v1254 = vmul.f32 %v1233, %v1252
  %v1255 = vmax.f32 %v1253, 0.0
  %v1256 = vmax.f32 %v1254, 0.0
  %v1257 = vsel %vm593, %v1210, 0.0
  %v1258 = vsel %vm593, %v1223, 0.0
  %v1259 = vadd.f32 %v1257, %v1258
  %1260 = vadd.xlane.f32.xlu0 %v1259
  %v1261 = vpop.xlane.xlu0 %1260
  %v1262 = vmul.f32 %v1261, %v726
  %v1263 = vsub.f32 %v1210, %v1262
  %v1264 = vsub.f32 %v1223, %v1262
  %v1265 = vmul.f32 %v1263, %v1263
  %v1266 = vmul.f32 %v1264, %v1264
  %v1267 = vsel %vm593, %v1265, 0.0
  %v1268 = vsel %vm593, %v1266, 0.0
  %v1269 = vadd.f32 %v1267, %v1268
  %1270 = vadd.xlane.f32.xlu0 %v1269
  %v1271 = vpop.xlane.xlu0 %1270
  %v1272 = vmul.f32 %v1271, %v726
  %v1273 = vadd.f32 %v1272, 1e-05
  %v1274 = vrsqrt.pop %v1273
  %v1275 = vmul.f32 %v1274, %v1273
  %v1276 = vmul.f32 %v1275, %v1274
  %v1277 = vmul.f32 0.5, %v1276
  %v1278 = vsub.f32 1.5, %v1277
  %v1279 = vmul.f32 %v1274, %v1278
  %vm1280 = vweird.f32 %v1273
  %vm1281 = vweird.f32 %v1274
  %vm1282 = vmor %vm1280, %vm1281
  %v1283 = vsel %vm1282, %v1274, %v1279
  %v1284 = vmul.f32 %v1263, %v1283
  %v1285 = vmul.f32 %v1264, %v1283
  %v1286 = vmax.f32 %v1284, 0.0
  %v1287 = vmax.f32 %v1285, 0.0
  %v1288 = vld [vmem:[%s4] sm:$0xf]
  %1289 = vrot.lane.b32.xlu0 %v1255, 17
  %v1290 = vpop.permute.xlu0 %1289
  %1291 = vrot.lane.b32.xlu0 %v1256, 17
  %v1292 = vpop.permute.xlu0 %1291
  %1293 = vrot.lane.b32.xlu0 %v1286, 17
  %v1294 = vpop.permute.xlu0 %1293
  %1295 = vrot.lane.b32.xlu0 %v1287, 17
  %v1296 = vpop.permute.xlu0 %1295
  %v1297 = vsel %vm54, %v1294, %v1296
  %v1298 = vsel %vm54, %v1292, %v1294
  %v1299 = vsel %vm54, %v1290, %v1292
  %v1300 = vsel %vm54, %v1296, %v1290
  %v1301 = vpack.c.bf16 %v1299, %v1300
  %v1302 = vpack.c.bf16 %v1297, %v1298
  %v1303 = vunpack.c.l.bf16 %v1301
  %v1304 = vunpack.c.h.bf16 %v1301
  %v1305 = vunpack.c.l.bf16 %v1302
  %v1306 = vunpack.c.h.bf16 %v1302
  %v1307 = vmul.f32 %v1303, %v91
  %v1308 = vmul.f32 %v1304, %v92
  %v1309 = vmul.f32 %v1305, %v93
  %v1310 = vmul.f32 %v1306, %v94
  %v1311 = vpack.c.bf16 %v1308, %v1307
  %v1312 = vpack.c.bf16 %v1310, %v1309
  %1313 = vrot.lane.b32.xlu0 %v1255, 16
  %v1314 = vpop.permute.xlu0 %1313
  %1315 = vrot.lane.b32.xlu0 %v1256, 16
  %v1316 = vpop.permute.xlu0 %1315
  %1317 = vrot.lane.b32.xlu0 %v1286, 16
  %v1318 = vpop.permute.xlu0 %1317
  %1319 = vrot.lane.b32.xlu0 %v1287, 16
  %v1320 = vpop.permute.xlu0 %1319
  %v1321 = vsel %vm120, %v1318, %v1320
  %v1322 = vsel %vm120, %v1316, %v1318
  %v1323 = vsel %vm120, %v1314, %v1316
  %v1324 = vsel %vm120, %v1320, %v1314
  %v1325 = vpack.c.bf16 %v1323, %v1324
  %v1326 = vpack.c.bf16 %v1321, %v1322
  %v1327 = vunpack.c.l.bf16 %v1325
  %v1328 = vunpack.c.h.bf16 %v1325
  %v1329 = vunpack.c.l.bf16 %v1326
  %v1330 = vunpack.c.h.bf16 %v1326
  %v1331 = vmul.f32 %v1327, %v147
  %v1332 = vmul.f32 %v1328, %v148
  %v1333 = vmul.f32 %v1329, %v149
  %v1334 = vmul.f32 %v1330, %v150
  %v1335 = vpack.c.bf16 %v1332, %v1331
  %v1336 = vpack.c.bf16 %v1334, %v1333
  %1337 = vrot.lane.b32.xlu0 %v1255, 15
  %v1338 = vpop.permute.xlu0 %1337
  %1339 = vrot.lane.b32.xlu0 %v1256, 15
  %v1340 = vpop.permute.xlu0 %1339
  %1341 = vrot.lane.b32.xlu0 %v1286, 15
  %v1342 = vpop.permute.xlu0 %1341
  %1343 = vrot.lane.b32.xlu0 %v1287, 15
  %v1344 = vpop.permute.xlu0 %1343
  %v1345 = vsel %vm176, %v1342, %v1344
  %v1346 = vsel %vm176, %v1340, %v1342
  %v1347 = vsel %vm176, %v1338, %v1340
  %v1348 = vsel %vm176, %v1344, %v1338
  %v1349 = vpack.c.bf16 %v1347, %v1348
  %v1350 = vpack.c.bf16 %v1345, %v1346
  %v1351 = vunpack.c.l.bf16 %v1349
  %v1352 = vunpack.c.h.bf16 %v1349
  %v1353 = vunpack.c.l.bf16 %v1350
  %v1354 = vunpack.c.h.bf16 %v1350
  %v1355 = vmul.f32 %v1351, %v191
  %v1356 = vmul.f32 %v1352, %v192
  %v1357 = vmul.f32 %v1353, %v193
  %v1358 = vmul.f32 %v1354, %v194
  %v1359 = vpack.c.bf16 %v1356, %v1355
  %v1360 = vpack.c.bf16 %v1358, %v1357
  %1361 = vrot.lane.b32.xlu0 %v1255, 1
  %v1362 = vpop.permute.xlu0 %1361
  %1363 = vrot.lane.b32.xlu0 %v1256, 1
  %v1364 = vpop.permute.xlu0 %1363
  %1365 = vrot.lane.b32.xlu0 %v1286, 1
  %v1366 = vpop.permute.xlu0 %1365
  %1367 = vrot.lane.b32.xlu0 %v1287, 1
  %v1368 = vpop.permute.xlu0 %1367
  %v1369 = vsel %vm220, %v1366, %v1368
  %v1370 = vsel %vm220, %v1364, %v1366
  %v1371 = vsel %vm220, %v1362, %v1364
  %v1372 = vsel %vm220, %v1368, %v1362
  %v1373 = vpack.c.bf16 %v1371, %v1372
  %v1374 = vpack.c.bf16 %v1369, %v1370
  %v1375 = vunpack.c.l.bf16 %v1373
  %v1376 = vunpack.c.h.bf16 %v1373
  %v1377 = vunpack.c.l.bf16 %v1374
  %v1378 = vunpack.c.h.bf16 %v1374
  %v1379 = vmul.f32 %v1375, %v235
  %v1380 = vmul.f32 %v1376, %v236
  %v1381 = vmul.f32 %v1377, %v237
  %v1382 = vmul.f32 %v1378, %v238
  %v1383 = vpack.c.bf16 %v1380, %v1379
  %v1384 = vpack.c.bf16 %v1382, %v1381
  %v1385 = vpack.c.bf16 %v1256, %v1255
  %v1386 = vpack.c.bf16 %v1287, %v1286
  %v1387 = vunpack.c.l.bf16 %v1385
  %v1388 = vunpack.c.h.bf16 %v1385
  %v1389 = vunpack.c.l.bf16 %v1386
  %v1390 = vunpack.c.h.bf16 %v1386
  %v1391 = vmul.f32 %v1387, %v266
  %v1392 = vmul.f32 %v1388, %v267
  %v1393 = vmul.f32 %v1389, %v268
  %v1394 = vmul.f32 %v1390, %v269
  %v1395 = vpack.c.bf16 %v1392, %v1391
  %v1396 = vpack.c.bf16 %v1394, %v1393
  %1397 = vrot.lane.b32.xlu0 %v1255, 127
  %v1398 = vpop.permute.xlu0 %1397
  %1399 = vrot.lane.b32.xlu0 %v1256, 127
  %v1400 = vpop.permute.xlu0 %1399
  %1401 = vrot.lane.b32.xlu0 %v1286, 127
  %v1402 = vpop.permute.xlu0 %1401
  %1403 = vrot.lane.b32.xlu0 %v1287, 127
  %v1404 = vpop.permute.xlu0 %1403
  %v1405 = vsel %vm295, %v1402, %v1404
  %v1406 = vsel %vm295, %v1400, %v1402
  %v1407 = vsel %vm295, %v1398, %v1400
  %v1408 = vsel %vm295, %v1404, %v1398
  %v1409 = vpack.c.bf16 %v1406, %v1407
  %v1410 = vpack.c.bf16 %v1408, %v1405
  %v1411 = vunpack.c.l.bf16 %v1409
  %v1412 = vunpack.c.h.bf16 %v1409
  %v1413 = vunpack.c.l.bf16 %v1410
  %v1414 = vunpack.c.h.bf16 %v1410
  %v1415 = vmul.f32 %v1411, %v310
  %v1416 = vmul.f32 %v1412, %v311
  %v1417 = vmul.f32 %v1413, %v312
  %v1418 = vmul.f32 %v1414, %v313
  %v1419 = vpack.c.bf16 %v1416, %v1415
  %v1420 = vpack.c.bf16 %v1418, %v1417
  %1421 = vrot.lane.b32.xlu0 %v1255, 113
  %v1422 = vpop.permute.xlu0 %1421
  %1423 = vrot.lane.b32.xlu0 %v1256, 113
  %v1424 = vpop.permute.xlu0 %1423
  %1425 = vrot.lane.b32.xlu0 %v1286, 113
  %v1426 = vpop.permute.xlu0 %1425
  %1427 = vrot.lane.b32.xlu0 %v1287, 113
  %v1428 = vpop.permute.xlu0 %1427
  %v1429 = vsel %vm339, %v1426, %v1428
  %v1430 = vsel %vm339, %v1424, %v1426
  %v1431 = vsel %vm339, %v1422, %v1424
  %v1432 = vsel %vm339, %v1428, %v1422
  %v1433 = vpack.c.bf16 %v1430, %v1431
  %v1434 = vpack.c.bf16 %v1432, %v1429
  %v1435 = vunpack.c.l.bf16 %v1433
  %v1436 = vunpack.c.h.bf16 %v1433
  %v1437 = vunpack.c.l.bf16 %v1434
  %v1438 = vunpack.c.h.bf16 %v1434
  %v1439 = vmul.f32 %v1435, %v354
  %v1440 = vmul.f32 %v1436, %v355
  %v1441 = vmul.f32 %v1437, %v356
  %v1442 = vmul.f32 %v1438, %v357
  %v1443 = vpack.c.bf16 %v1440, %v1439
  %v1444 = vpack.c.bf16 %v1442, %v1441
  %1445 = vrot.lane.b32.xlu0 %v1255, 112
  %v1446 = vpop.permute.xlu0 %1445
  %1447 = vrot.lane.b32.xlu0 %v1256, 112
  %v1448 = vpop.permute.xlu0 %1447
  %1449 = vrot.lane.b32.xlu0 %v1286, 112
  %v1450 = vpop.permute.xlu0 %1449
  %1451 = vrot.lane.b32.xlu0 %v1287, 112
  %v1452 = vpop.permute.xlu0 %1451
  %v1453 = vsel %vm383, %v1450, %v1452
  %v1454 = vsel %vm383, %v1448, %v1450
  %v1455 = vsel %vm383, %v1446, %v1448
  %v1456 = vsel %vm383, %v1452, %v1446
  %v1457 = vpack.c.bf16 %v1454, %v1455
  %v1458 = vpack.c.bf16 %v1456, %v1453
  %v1459 = vunpack.c.l.bf16 %v1457
  %v1460 = vunpack.c.h.bf16 %v1457
  %v1461 = vunpack.c.l.bf16 %v1458
  %v1462 = vunpack.c.h.bf16 %v1458
  %v1463 = vmul.f32 %v1459, %v398
  %v1464 = vmul.f32 %v1460, %v399
  %v1465 = vmul.f32 %v1461, %v400
  %v1466 = vmul.f32 %v1462, %v401
  %v1467 = vpack.c.bf16 %v1464, %v1463
  %v1468 = vpack.c.bf16 %v1466, %v1465
  %1469 = vrot.lane.b32.xlu0 %v1255, 111
  %v1470 = vpop.permute.xlu0 %1469
  %1471 = vrot.lane.b32.xlu0 %v1256, 111
  %v1472 = vpop.permute.xlu0 %1471
  %1473 = vrot.lane.b32.xlu0 %v1286, 111
  %v1474 = vpop.permute.xlu0 %1473
  %1475 = vrot.lane.b32.xlu0 %v1287, 111
  %v1476 = vpop.permute.xlu0 %1475
  %v1477 = vsel %vm427, %v1474, %v1476
  %v1478 = vsel %vm427, %v1472, %v1474
  %v1479 = vsel %vm427, %v1470, %v1472
  %v1480 = vsel %vm427, %v1476, %v1470
  %v1481 = vpack.c.bf16 %v1478, %v1479
  %v1482 = vpack.c.bf16 %v1480, %v1477
  %v1483 = vunpack.c.l.bf16 %v1481
  %v1484 = vunpack.c.h.bf16 %v1481
  %v1485 = vunpack.c.l.bf16 %v1482
  %v1486 = vunpack.c.h.bf16 %v1482
  %v1487 = vmul.f32 %v1483, %v464
  %v1488 = vmul.f32 %v1484, %v465
  %v1489 = vmul.f32 %v1485, %v466
  %v1490 = vmul.f32 %v1486, %v467
  %v1491 = vpack.c.bf16 %v1488, %v1487
  %v1492 = vpack.c.bf16 %v1490, %v1489
  %v1495 = vunpack.c.l.b16 %v1311
  %v1496 = vunpack.c.h.b16 %v1311
  %v1497 = vunpack.c.l.b16 %v1312
  %v1498 = vunpack.c.h.b16 %v1312
  %v1499 = vpack.c.b16 %v1495, %v1495
  %v1500 = vpack.c.b16 %v1496, %v1496
  %v1501 = vpack.c.b16 %v1497, %v1497
  %v1502 = vpack.c.b16 %v1498, %v1498
  %v1505 = vunpack.c.l.b16 %v1335
  %v1506 = vunpack.c.h.b16 %v1335
  %v1507 = vunpack.c.l.b16 %v1336
  %v1508 = vunpack.c.h.b16 %v1336
  %v1509 = vpack.c.b16 %v1505, %v1505
  %v1510 = vpack.c.b16 %v1506, %v1506
  %v1511 = vpack.c.b16 %v1507, %v1507
  %v1512 = vpack.c.b16 %v1508, %v1508
  %v1513 = vrot.slane %v1509, 6
  %v1514 = vrot.slane %v1510, 6
  %v1515 = vrot.slane %v1511, 6
  %v1516 = vrot.slane %v1512, 6
  %v1519 = vunpack.c.l.b16 %v1359
  %v1520 = vunpack.c.h.b16 %v1359
  %v1521 = vunpack.c.l.b16 %v1360
  %v1522 = vunpack.c.h.b16 %v1360
  %v1523 = vpack.c.b16 %v1519, %v1519
  %v1524 = vpack.c.b16 %v1520, %v1520
  %v1525 = vpack.c.b16 %v1521, %v1521
  %v1526 = vpack.c.b16 %v1522, %v1522
  %v1529 = vunpack.c.l.b16 %v1383
  %v1530 = vunpack.c.h.b16 %v1383
  %v1531 = vunpack.c.l.b16 %v1384
  %v1532 = vunpack.c.h.b16 %v1384
  %v1533 = vpack.c.b16 %v1529, %v1529
  %v1534 = vpack.c.b16 %v1530, %v1530
  %v1535 = vpack.c.b16 %v1531, %v1531
  %v1536 = vpack.c.b16 %v1532, %v1532
  %v1537 = vrot.slane %v1533, 2
  %v1538 = vrot.slane %v1534, 2
  %v1539 = vrot.slane %v1535, 2
  %v1540 = vrot.slane %v1536, 2
  %v1543 = vunpack.c.l.b16 %v1395
  %v1544 = vunpack.c.h.b16 %v1395
  %v1545 = vunpack.c.l.b16 %v1396
  %v1546 = vunpack.c.h.b16 %v1396
  %v1547 = vpack.c.b16 %v1543, %v1543
  %v1548 = vpack.c.b16 %v1544, %v1544
  %v1549 = vpack.c.b16 %v1545, %v1545
  %v1550 = vpack.c.b16 %v1546, %v1546
  %v1553 = vunpack.c.l.b16 %v1419
  %v1554 = vunpack.c.h.b16 %v1419
  %v1555 = vunpack.c.l.b16 %v1420
  %v1556 = vunpack.c.h.b16 %v1420
  %v1557 = vpack.c.b16 %v1553, %v1553
  %v1558 = vpack.c.b16 %v1554, %v1554
  %v1559 = vpack.c.b16 %v1555, %v1555
  %v1560 = vpack.c.b16 %v1556, %v1556
  %v1561 = vrot.slane %v1557, 6
  %v1562 = vrot.slane %v1558, 6
  %v1563 = vrot.slane %v1559, 6
  %v1564 = vrot.slane %v1560, 6
  %v1567 = vunpack.c.l.b16 %v1443
  %v1568 = vunpack.c.h.b16 %v1443
  %v1569 = vunpack.c.l.b16 %v1444
  %v1570 = vunpack.c.h.b16 %v1444
  %v1571 = vpack.c.b16 %v1567, %v1567
  %v1572 = vpack.c.b16 %v1568, %v1568
  %v1573 = vpack.c.b16 %v1569, %v1569
  %v1574 = vpack.c.b16 %v1570, %v1570
  %v1577 = vunpack.c.l.b16 %v1467
  %v1578 = vunpack.c.h.b16 %v1467
  %v1579 = vunpack.c.l.b16 %v1468
  %v1580 = vunpack.c.h.b16 %v1468
  %v1581 = vpack.c.b16 %v1577, %v1577
  %v1582 = vpack.c.b16 %v1578, %v1578
  %v1583 = vpack.c.b16 %v1579, %v1579
  %v1584 = vpack.c.b16 %v1580, %v1580
  %v1585 = vrot.slane %v1581, 2
  %v1586 = vrot.slane %v1582, 2
  %v1587 = vrot.slane %v1583, 2
  %v1588 = vrot.slane %v1584, 2
  %v1591 = vunpack.c.l.b16 %v1491
  %v1592 = vunpack.c.h.b16 %v1491
  %v1593 = vunpack.c.l.b16 %v1492
  %v1594 = vunpack.c.h.b16 %v1492
  %v1595 = vpack.c.b16 %v1591, %v1591
  %v1596 = vpack.c.b16 %v1592, %v1592
  %v1597 = vpack.c.b16 %v1593, %v1593
  %v1598 = vpack.c.b16 %v1594, %v1594
  %v1601 = vsel %vm580, %v1499, %v1513
  %v1604 = vsel %vm580, %v1500, %v1514
  %v1607 = vsel %vm580, %v1501, %v1515
  %v1610 = vsel %vm580, %v1502, %v1516
  %v1612 = vsel %vm593, %v1601, %v1523
  %v1614 = vsel %vm593, %v1604, %v1524
  %v1616 = vsel %vm593, %v1607, %v1525
  %v1618 = vsel %vm593, %v1610, %v1526
  %v1620 = vsel %vm602, %v1612, %v1537
  %v1623 = vsel %vm602, %v1614, %v1538
  %v1626 = vsel %vm602, %v1616, %v1539
  %v1629 = vsel %vm602, %v1618, %v1540
  %v1633 = vsel %vm580, %v1547, %v1561
  %v1636 = vsel %vm580, %v1548, %v1562
  %v1639 = vsel %vm580, %v1549, %v1563
  %v1642 = vsel %vm580, %v1550, %v1564
  %v1644 = vsel %vm593, %v1633, %v1571
  %v1646 = vsel %vm593, %v1636, %v1572
  %v1648 = vsel %vm593, %v1639, %v1573
  %v1650 = vsel %vm593, %v1642, %v1574
  %v1652 = vsel %vm602, %v1644, %v1585
  %v1655 = vsel %vm602, %v1646, %v1586
  %v1658 = vsel %vm602, %v1648, %v1587
  %v1661 = vsel %vm602, %v1650, %v1588
  %v1664 = vsel %vm647, %v1288, 0
  %v1667 = vsel %vm580, %v1595, 0
  %v1670 = vsel %vm580, %v1596, 0
  %v1673 = vsel %vm580, %v1597, 0
  %v1676 = vsel %vm580, %v1598, 0
  %1678 = vmatpush.bf16.msra.mxu0 0
  %1679 = vmatpush.bf16.msra.mxu0 0
  %1680 = vmatpush.bf16.msra.mxu0 0
  %1681 = vmatpush.bf16.msra.mxu0 0
  %1682 = vmatpush.bf16.msra.mxu0 0
  %1683 = vmatpush.bf16.msra.mxu0 %v1667
  %1684 = vmatpush.bf16.msra.mxu0 %v1652
  %1685 = vmatpush.bf16.msra.mxu0 %v1620
  %1686 = vmatmul.bf16.gmra.mxu0 %v1664
  %v1687 = vpop.f32.mrf.mxu0
  %v1688 = vadd.f32 0.0, %v1687
  %v1689 = vpop.f32.mrf.mxu0
  %1690 = vdwg.mxu0
  %1691 = vmatpush.bf16.msra.mxu0 0
  %1692 = vmatpush.bf16.msra.mxu0 0
  %1693 = vmatpush.bf16.msra.mxu0 0
  %1694 = vmatpush.bf16.msra.mxu0 0
  %1695 = vmatpush.bf16.msra.mxu0 0
  %1696 = vmatpush.bf16.msra.mxu0 %v1670
  %1697 = vmatpush.bf16.msra.mxu0 %v1655
  %1698 = vmatpush.bf16.msra.mxu0 %v1623
  %1699 = vmatmul.bf16.gmra.mxu0 %v1664
  %v1700 = vpop.f32.mrf.mxu0
  %v1701 = vadd.f32 0.0, %v1700
  %v1702 = vpop.f32.mrf.mxu0
  %1703 = vdwg.mxu0
  %1704 = vmatpush.bf16.msra.mxu0 0
  %1705 = vmatpush.bf16.msra.mxu0 0
  %1706 = vmatpush.bf16.msra.mxu0 0
  %1707 = vmatpush.bf16.msra.mxu0 0
  %1708 = vmatpush.bf16.msra.mxu0 0
  %1709 = vmatpush.bf16.msra.mxu0 %v1673
  %1710 = vmatpush.bf16.msra.mxu0 %v1658
  %1711 = vmatpush.bf16.msra.mxu0 %v1626
  %1712 = vmatmul.bf16.gmra.mxu0 %v1664
  %v1713 = vpop.f32.mrf.mxu0
  %v1714 = vadd.f32 0.0, %v1713
  %v1715 = vpop.f32.mrf.mxu0
  %1716 = vdwg.mxu0
  %1717 = vmatpush.bf16.msra.mxu0 0
  %1718 = vmatpush.bf16.msra.mxu0 0
  %1719 = vmatpush.bf16.msra.mxu0 0
  %1720 = vmatpush.bf16.msra.mxu0 0
  %1721 = vmatpush.bf16.msra.mxu0 0
  %1722 = vmatpush.bf16.msra.mxu0 %v1676
  %1723 = vmatpush.bf16.msra.mxu0 %v1661
  %1724 = vmatpush.bf16.msra.mxu0 %v1629
  %1725 = vmatmul.bf16.gmra.mxu0 %v1664
  %v1726 = vpop.f32.mrf.mxu0
  %v1727 = vadd.f32 0.0, %v1726
  %v1728 = vpop.f32.mrf.mxu0
  %1729 = vdwg.mxu0
  %v1730 = vpack.c.bf16 %v1688, %v1688
  %v1731 = vpack.c.bf16 %v1701, %v1701
  %v1732 = vpack.c.bf16 %v1714, %v1714
  %v1733 = vpack.c.bf16 %v1727, %v1727
  %v1734 = vld [vmem:[%s5] sm:$0xf]
  %v1735 = vld [vmem:[%s5 + $0x4] sm:$0xf]
  %v1736 = vld [vmem:[%s5 + $0x8] sm:$0xf]
  %v1737 = vld [vmem:[%s5 + $0xc] sm:$0xf]
  %v1738 = vld [vmem:[%s5 + $0x10] sm:$0xf]
  %v1739 = vld [vmem:[%s5 + $0x14] sm:$0xf]
  %v1740 = vld [vmem:[%s5 + $0x18] sm:$0xf]
  %v1741 = vld [vmem:[%s5 + $0x1c] sm:$0xf]
  %v1742 = vld [vmem:[%s5 + $0x20] sm:$0xf]
  %v1743 = vld [vmem:[%s5 + $0x24] sm:$0xf]
  %v1744 = vld [vmem:[%s5 + $0x28] sm:$0xf]
  %v1745 = vld [vmem:[%s5 + $0x2c] sm:$0xf]
  %v1746 = vld [vmem:[%s5 + $0x30] sm:$0xf]
  %v1747 = vld [vmem:[%s5 + $0x34] sm:$0xf]
  %v1748 = vld [vmem:[%s5 + $0x38] sm:$0xf]
  %v1749 = vld [vmem:[%s5 + $0x3c] sm:$0xf]
  %v1750 = vld [vmem:[%s5 + $0x40] sm:$0xf]
  %v1751 = vld [vmem:[%s5 + $0x44] sm:$0xf]
  %v1752 = vld [vmem:[%s5 + $0x48] sm:$0xf]
  %v1753 = vld [vmem:[%s5 + $0x4c] sm:$0xf]
  %v1754 = vld [vmem:[%s5 + $0x50] sm:$0xf]
  %v1755 = vld [vmem:[%s5 + $0x54] sm:$0xf]
  %v1756 = vld [vmem:[%s5 + $0x58] sm:$0xf]
  %v1757 = vld [vmem:[%s5 + $0x5c] sm:$0xf]
  %v1758 = vld [vmem:[%s5 + $0x60] sm:$0xf]
  %v1759 = vld [vmem:[%s5 + $0x64] sm:$0xf]
  %v1760 = vld [vmem:[%s5 + $0x68] sm:$0xf]
  %v1761 = vld [vmem:[%s5 + $0x6c] sm:$0xf]
  %v1762 = vld [vmem:[%s5 + $0x70] sm:$0xf]
  %v1763 = vld [vmem:[%s5 + $0x74] sm:$0xf]
  %v1764 = vld [vmem:[%s5 + $0x78] sm:$0xf]
  %v1765 = vld [vmem:[%s5 + $0x7c] sm:$0xf]
  %v1766 = vld [vmem:[%s5 + $0x80] sm:$0xf]
  %v1767 = vld [vmem:[%s5 + $0x84] sm:$0xf]
  %v1768 = vld [vmem:[%s5 + $0x88] sm:$0xf]
  %v1769 = vld [vmem:[%s5 + $0x8c] sm:$0xf]
  %v1770 = vld [vmem:[%s5 + $0x90] sm:$0xf]
  %v1771 = vld [vmem:[%s5 + $0x94] sm:$0xf]
  %v1772 = vld [vmem:[%s5 + $0x98] sm:$0xf]
  %v1773 = vld [vmem:[%s5 + $0x9c] sm:$0xf]
  %v1774 = vld [vmem:[%s5 + $0xa0] sm:$0xf]
  %v1775 = vld [vmem:[%s5 + $0xa4] sm:$0xf]
  %v1776 = vld [vmem:[%s5 + $0xa8] sm:$0xf]
  %v1777 = vld [vmem:[%s5 + $0xac] sm:$0xf]
  %v1778 = vld [vmem:[%s5 + $0xb0] sm:$0xf]
  %v1779 = vld [vmem:[%s5 + $0xb4] sm:$0xf]
  %v1780 = vld [vmem:[%s5 + $0xb8] sm:$0xf]
  %v1781 = vld [vmem:[%s5 + $0xbc] sm:$0xf]
  %v1782 = vld [vmem:[%s5 + $0xc0] sm:$0xf]
  %v1783 = vld [vmem:[%s5 + $0xc4] sm:$0xf]
  %v1784 = vld [vmem:[%s5 + $0xc8] sm:$0xf]
  %v1785 = vld [vmem:[%s5 + $0xcc] sm:$0xf]
  %v1786 = vld [vmem:[%s5 + $0xd0] sm:$0xf]
  %v1787 = vld [vmem:[%s5 + $0xd4] sm:$0xf]
  %v1788 = vld [vmem:[%s5 + $0xd8] sm:$0xf]
  %v1789 = vld [vmem:[%s5 + $0xdc] sm:$0xf]
  %v1790 = vld [vmem:[%s5 + $0xe0] sm:$0xf]
  %v1791 = vld [vmem:[%s5 + $0xe4] sm:$0xf]
  %v1792 = vld [vmem:[%s5 + $0xe8] sm:$0xf]
  %v1793 = vld [vmem:[%s5 + $0xec] sm:$0xf]
  %v1794 = vld [vmem:[%s5 + $0xf0] sm:$0xf]
  %v1795 = vld [vmem:[%s5 + $0xf4] sm:$0xf]
  %v1796 = vld [vmem:[%s5 + $0xf8] sm:$0xf]
  %v1797 = vld [vmem:[%s5 + $0xfc] sm:$0xf]
  %v1862 = vunpack.c.l.b16 %v1734
  %v1863 = vunpack.c.l.b16 %v1735
  %v1864 = vunpack.c.l.b16 %v1736
  %v1865 = vunpack.c.l.b16 %v1737
  %v1866 = vunpack.c.l.b16 %v1738
  %v1867 = vunpack.c.l.b16 %v1739
  %v1868 = vunpack.c.l.b16 %v1740
  %v1869 = vunpack.c.l.b16 %v1741
  %v1870 = vunpack.c.l.b16 %v1742
  %v1871 = vunpack.c.l.b16 %v1743
  %v1872 = vunpack.c.l.b16 %v1744
  %v1873 = vunpack.c.l.b16 %v1745
  %v1874 = vunpack.c.l.b16 %v1746
  %v1875 = vunpack.c.l.b16 %v1747
  %v1876 = vunpack.c.l.b16 %v1748
  %v1877 = vunpack.c.l.b16 %v1749
  %v1878 = vunpack.c.l.b16 %v1750
  %v1879 = vunpack.c.l.b16 %v1751
  %v1880 = vunpack.c.l.b16 %v1752
  %v1881 = vunpack.c.l.b16 %v1753
  %v1882 = vunpack.c.l.b16 %v1754
  %v1883 = vunpack.c.l.b16 %v1755
  %v1884 = vunpack.c.l.b16 %v1756
  %v1885 = vunpack.c.l.b16 %v1757
  %v1886 = vunpack.c.l.b16 %v1758
  %v1887 = vunpack.c.l.b16 %v1759
  %v1888 = vunpack.c.l.b16 %v1760
  %v1889 = vunpack.c.l.b16 %v1761
  %v1890 = vunpack.c.l.b16 %v1762
  %v1891 = vunpack.c.l.b16 %v1763
  %v1892 = vunpack.c.l.b16 %v1764
  %v1893 = vunpack.c.l.b16 %v1765
  %v1894 = vunpack.c.l.b16 %v1766
  %v1895 = vunpack.c.l.b16 %v1767
  %v1896 = vunpack.c.l.b16 %v1768
  %v1897 = vunpack.c.l.b16 %v1769
  %v1898 = vunpack.c.l.b16 %v1770
  %v1899 = vunpack.c.l.b16 %v1771
  %v1900 = vunpack.c.l.b16 %v1772
  %v1901 = vunpack.c.l.b16 %v1773
  %v1902 = vunpack.c.l.b16 %v1774
  %v1903 = vunpack.c.l.b16 %v1775
  %v1904 = vunpack.c.l.b16 %v1776
  %v1905 = vunpack.c.l.b16 %v1777
  %v1906 = vunpack.c.l.b16 %v1778
  %v1907 = vunpack.c.l.b16 %v1779
  %v1908 = vunpack.c.l.b16 %v1780
  %v1909 = vunpack.c.l.b16 %v1781
  %v1910 = vunpack.c.l.b16 %v1782
  %v1911 = vunpack.c.l.b16 %v1783
  %v1912 = vunpack.c.l.b16 %v1784
  %v1913 = vunpack.c.l.b16 %v1785
  %v1914 = vunpack.c.l.b16 %v1786
  %v1915 = vunpack.c.l.b16 %v1787
  %v1916 = vunpack.c.l.b16 %v1788
  %v1917 = vunpack.c.l.b16 %v1789
  %v1918 = vunpack.c.l.b16 %v1790
  %v1919 = vunpack.c.l.b16 %v1791
  %v1920 = vunpack.c.l.b16 %v1792
  %v1921 = vunpack.c.l.b16 %v1793
  %v1922 = vunpack.c.l.b16 %v1794
  %v1923 = vunpack.c.l.b16 %v1795
  %v1924 = vunpack.c.l.b16 %v1796
  %v1925 = vunpack.c.l.b16 %v1797
  %v1926 = vpack.c.b16 %v1863, %v1862
  %v1927 = vpack.c.b16 %v1865, %v1864
  %v1928 = vpack.c.b16 %v1867, %v1866
  %v1929 = vpack.c.b16 %v1869, %v1868
  %v1930 = vpack.c.b16 %v1871, %v1870
  %v1931 = vpack.c.b16 %v1873, %v1872
  %v1932 = vpack.c.b16 %v1875, %v1874
  %v1933 = vpack.c.b16 %v1877, %v1876
  %v1934 = vpack.c.b16 %v1879, %v1878
  %v1935 = vpack.c.b16 %v1881, %v1880
  %v1936 = vpack.c.b16 %v1883, %v1882
  %v1937 = vpack.c.b16 %v1885, %v1884
  %v1938 = vpack.c.b16 %v1887, %v1886
  %v1939 = vpack.c.b16 %v1889, %v1888
  %v1940 = vpack.c.b16 %v1891, %v1890
  %v1941 = vpack.c.b16 %v1893, %v1892
  %v1942 = vpack.c.b16 %v1895, %v1894
  %v1943 = vpack.c.b16 %v1897, %v1896
  %v1944 = vpack.c.b16 %v1899, %v1898
  %v1945 = vpack.c.b16 %v1901, %v1900
  %v1946 = vpack.c.b16 %v1903, %v1902
  %v1947 = vpack.c.b16 %v1905, %v1904
  %v1948 = vpack.c.b16 %v1907, %v1906
  %v1949 = vpack.c.b16 %v1909, %v1908
  %v1950 = vpack.c.b16 %v1911, %v1910
  %v1951 = vpack.c.b16 %v1913, %v1912
  %v1952 = vpack.c.b16 %v1915, %v1914
  %v1953 = vpack.c.b16 %v1917, %v1916
  %v1954 = vpack.c.b16 %v1919, %v1918
  %v1955 = vpack.c.b16 %v1921, %v1920
  %v1956 = vpack.c.b16 %v1923, %v1922
  %v1957 = vpack.c.b16 %v1925, %v1924
  %1990 = vmatpush.bf16.msra.mxu0 %v1933
  %1991 = vmatpush.bf16.msra.mxu0 %v1932
  %1992 = vmatpush.bf16.msra.mxu0 %v1931
  %1993 = vmatpush.bf16.msra.mxu0 %v1930
  %1994 = vmatpush.bf16.msra.mxu0 %v1929
  %1995 = vmatpush.bf16.msra.mxu0 %v1928
  %1996 = vmatpush.bf16.msra.mxu0 %v1927
  %1997 = vmatpush.bf16.msra.mxu0 %v1926
  %1998 = vmatmul.bf16.gmra.mxu0 %v1730
  %v1999 = vpop.f32.mrf.mxu0
  %v2000 = vadd.f32 0.0, %v1999
  %v2001 = vpop.f32.mrf.mxu0
  %2002 = vdwg.mxu0
  %2003 = vmatpush.bf16.msra.mxu0 %v1941
  %2004 = vmatpush.bf16.msra.mxu0 %v1940
  %2005 = vmatpush.bf16.msra.mxu0 %v1939
  %2006 = vmatpush.bf16.msra.mxu0 %v1938
  %2007 = vmatpush.bf16.msra.mxu0 %v1937
  %2008 = vmatpush.bf16.msra.mxu0 %v1936
  %2009 = vmatpush.bf16.msra.mxu0 %v1935
  %2010 = vmatpush.bf16.msra.mxu0 %v1934
  %2011 = vmatmul.bf16.gmra.mxu0 %v1731
  %v2012 = vpop.f32.mrf.mxu0
  %v2013 = vadd.f32 %v2000, %v2012
  %v2014 = vpop.f32.mrf.mxu0
  %2015 = vdwg.mxu0
  %2016 = vmatpush.bf16.msra.mxu0 %v1949
  %2017 = vmatpush.bf16.msra.mxu0 %v1948
  %2018 = vmatpush.bf16.msra.mxu0 %v1947
  %2019 = vmatpush.bf16.msra.mxu0 %v1946
  %2020 = vmatpush.bf16.msra.mxu0 %v1945
  %2021 = vmatpush.bf16.msra.mxu0 %v1944
  %2022 = vmatpush.bf16.msra.mxu0 %v1943
  %2023 = vmatpush.bf16.msra.mxu0 %v1942
  %2024 = vmatmul.bf16.gmra.mxu0 %v1732
  %v2025 = vpop.f32.mrf.mxu0
  %v2026 = vadd.f32 %v2013, %v2025
  %v2027 = vpop.f32.mrf.mxu0
  %2028 = vdwg.mxu0
  %2029 = vmatpush.bf16.msra.mxu0 %v1957
  %2030 = vmatpush.bf16.msra.mxu0 %v1956
  %2031 = vmatpush.bf16.msra.mxu0 %v1955
  %2032 = vmatpush.bf16.msra.mxu0 %v1954
  %2033 = vmatpush.bf16.msra.mxu0 %v1953
  %2034 = vmatpush.bf16.msra.mxu0 %v1952
  %2035 = vmatpush.bf16.msra.mxu0 %v1951
  %2036 = vmatpush.bf16.msra.mxu0 %v1950
  %2037 = vmatmul.bf16.gmra.mxu0 %v1733
  %v2038 = vpop.f32.mrf.mxu0
  %v2039 = vadd.f32 %v2026, %v2038
  %v2040 = vpop.f32.mrf.mxu0
  %2041 = vdwg.mxu0
  %vm2042 = vcmask 523264
  %v2043 = vsel %vm2042, %v2039, 0.0
  %2044 = vadd.xlane.f32.xlu0 %v2043
  %v2045 = vpop.xlane.xlu0 %2044
  %v2046 = vrcp.pop 64.0
  %v2047 = vmul.f32 64.0, %v2046
  %v2048 = vsub.f32 1.0, %v2047
  %v2049 = vmul.f32 %v2046, %v2048
  %v2050 = vadd.f32 %v2046, %v2049
  %vm2051 = vweird.f32 %v2046
  %v2052 = vsel %vm2051, %v2046, %v2050
  %v2053 = vmul.f32 %v2045, %v2052
  %v2054 = vsub.f32 %v2039, %v2053
  %v2055 = vmul.f32 %v2054, %v2054
  %v2056 = vsel %vm2042, %v2055, 0.0
  %2057 = vadd.xlane.f32.xlu0 %v2056
  %v2058 = vpop.xlane.xlu0 %2057
  %v2059 = vmul.f32 %v2058, %v2052
  %v2060 = vadd.f32 %v2059, 1e-05
  %v2061 = vrsqrt.pop %v2060
  %v2062 = vmul.f32 %v2061, %v2060
  %v2063 = vmul.f32 %v2062, %v2061
  %v2064 = vmul.f32 0.5, %v2063
  %v2065 = vsub.f32 1.5, %v2064
  %v2066 = vmul.f32 %v2061, %v2065
  %vm2067 = vweird.f32 %v2060
  %vm2068 = vweird.f32 %v2061
  %vm2069 = vmor %vm2067, %vm2068
  %v2070 = vsel %vm2069, %v2061, %v2066
  %v2071 = vmul.f32 %v2054, %v2070
  %v2072 = vmax.f32 %v2071, 0.0
  %2074 = vrot.lane.b32.xlu0 %v2039, 64
  %v2075 = vpop.permute.xlu0 %2074
  %v2077 = vsel %vm2042, %v2075, 0.0
  %2078 = vadd.xlane.f32.xlu0 %v2077
  %v2079 = vpop.xlane.xlu0 %2078
  %v2080 = vmul.f32 %v2079, %v2052
  %v2081 = vsub.f32 %v2039, %v2080
  %v2082 = vmul.f32 %v2081, %v2081
  %2084 = vrot.lane.b32.xlu0 %v2082, 64
  %v2085 = vpop.permute.xlu0 %2084
  %v2087 = vsel %vm2042, %v2085, 0.0
  %2088 = vadd.xlane.f32.xlu0 %v2087
  %v2089 = vpop.xlane.xlu0 %2088
  %v2090 = vmul.f32 %v2089, %v2052
  %v2091 = vadd.f32 %v2090, 1e-05
  %v2092 = vrsqrt.pop %v2091
  %v2093 = vmul.f32 %v2092, %v2091
  %v2094 = vmul.f32 %v2093, %v2092
  %v2095 = vmul.f32 0.5, %v2094
  %v2096 = vsub.f32 1.5, %v2095
  %v2097 = vmul.f32 %v2092, %v2096
  %vm2098 = vweird.f32 %v2091
  %vm2099 = vweird.f32 %v2092
  %vm2100 = vmor %vm2098, %vm2099
  %v2101 = vsel %vm2100, %v2092, %v2097
  %v2102 = vmul.f32 %v2081, %v2101
  %v2103 = vmax.f32 %v2102, 0.0
  %v2104 = vsel %vm2042, %v2072, %v2103
  %2105 = vst [vmem:[%s6] sm:$0xff] %v2104
  // Predicated region
  $region26: #{down_conv_block.1} parent=0 // pred_check
    _
  $region27: #{down_conv_block.1} parent=0 // pred_check_branch
    %2107 = sbr.rel (0) target = $region29
  $region28: #{down_conv_block.1} parent=0 // pred_region
    _
  $region29: #{down_conv_block.1} parent=0 // pred_fallthru
    _
  // Predicated region
  $region30: #{down_conv_block.1} parent=0 // pred_check
    _
  $region31: #{down_conv_block.1} parent=0 // pred_check_branch
    %2109 = sbr.rel (0) target = $region33
  $region32: #{down_conv_block.1} parent=0 // pred_region
    _
  $region33: #{down_conv_block.1} parent=0 // pred_fallthru
    _

</llo_original>
